<compile_context>
chip_gen: v7x
topology: tpu7x:2x2x1
jax: 0.10.0
libtpu: 0.0.40
codegen_flags: <defaults>
</compile_context>

<pallas_src>
import functools

import jax
import jax.numpy as jnp
from jax.experimental import pallas as pl
from jax.experimental.pallas import tpu as pltpu


# --------------------------------------------------------------------------- kernel

def _fused_hetgat_kernel(
    # node features
    feat_crew_ref, feat_plane_ref, feat_state_ref, feat_value_ref,
    # packed weights / biases, one per source node type
    w_crew_ref, b_crew_ref, w_plane_ref, b_plane_ref,
    w_state_ref, b_state_ref, w_value_ref, b_value_ref,
    # block-diagonal attention matrices [H*Dstate, H]
    a_c_src_ref, a_c_dst_ref, a_p_src_ref, a_p_dst_ref,
    # dense 0/1 adjacency matrices adj[dst, src]
    adj_c_in_ref, adj_p_in_ref, adj_rep_ref, adj_repby_ref,
    adj_p_to_ref, adj_s_to_ref,
    # outputs
    h_crew_ref, h_plane_ref, h_state_ref, h_value_ref,
    *, num_heads, d_state, hd_crew, hd_plane, hd_state, hd_value,
    alpha, use_relu):
    f32 = jnp.float32
    H, Ds = num_heads, d_state

    # ---- batched feature transforms: one matmul per source node type -------------
    crew_cat = (jnp.dot(feat_crew_ref[...], w_crew_ref[...],
                        preferred_element_type=f32) + b_crew_ref[...])
    plane_cat = (jnp.dot(feat_plane_ref[...], w_plane_ref[...],
                         preferred_element_type=f32) + b_plane_ref[...])
    state_cat = (jnp.dot(feat_state_ref[...], w_state_ref[...],
                         preferred_element_type=f32) + b_state_ref[...])
    wh_v_to = (jnp.dot(feat_value_ref[...], w_value_ref[...],
                       preferred_element_type=f32) + b_value_ref[...])

    # static column slices of the packed linear outputs
    wh_crew = crew_cat[:, 0:hd_crew]
    wh_c_in = crew_cat[:, hd_crew:hd_crew + hd_state]
    wh_repairing = crew_cat[:, hd_crew + hd_state:hd_crew + hd_state + hd_plane]

    o0, o1 = hd_plane, hd_plane + hd_state
    o2, o3 = o1 + hd_value, o1 + hd_value + hd_crew
    wh_plane = plane_cat[:, 0:o0]
    wh_p_in = plane_cat[:, o0:o1]
    wh_p_to = plane_cat[:, o1:o2]
    wh_repaired_by = plane_cat[:, o2:o3]

    wh_s_in = state_cat[:, 0:hd_state]
    wh_s_to = state_cat[:, hd_state:hd_state + hd_value]

    # ---- GAT edge-softmax aggregation (crew->state, plane->state) ----------------
    def gat(wh_src, wh_dst, a_src_blk, a_dst_blk, adj):
        mask = adj > 0.0
        # all-heads attention logits via block-diagonal matmuls:
        #   asrc_t[h, s] = <Wh_src[s, h*Ds:(h+1)*Ds], a_src[h]>
        asrc_t = jax.lax.dot_general(
            a_src_blk, wh_src,
            dimension_numbers=(((0,), (1,)), ((), ())),
            preferred_element_type=f32)                            # [H, Ns]
        adst = jnp.dot(wh_dst, a_dst_blk, preferred_element_type=f32)  # [Nd, H]
        parts = []
        for h in range(H):                                         # small static H
            e = adst[:, h:h + 1] + asrc_t[h:h + 1, :]              # [Nd, Ns]
            e = jnp.where(e >= 0.0, e, alpha * e)                  # LeakyReLU
            e = jnp.where(mask, e, -1e30)
            m = jnp.max(e, axis=1, keepdims=True)
            p = jnp.where(mask, jnp.exp(e - m), 0.0)
            denom = jnp.sum(p, axis=1, keepdims=True)
            attn = p / jnp.where(denom > 0.0, denom, 1.0)          # [Nd, Ns]
            parts.append(jnp.dot(attn, wh_src[:, h * Ds:(h + 1) * Ds],
                                 preferred_element_type=f32))      # [Nd, Ds]
        return jnp.concatenate(parts, axis=1)                      # [Nd, H*Ds]

    ft_c_in = gat(wh_c_in, wh_s_in, a_c_src_ref[...], a_c_dst_ref[...],
                  adj_c_in_ref[...])
    ft_p_in = gat(wh_p_in, wh_s_in, a_p_src_ref[...], a_p_dst_ref[...],
                  adj_p_in_ref[...])

    # ---- plain copy_src + sum aggregations ----------------------------------------
    ft_repaired_by = jnp.dot(adj_repby_ref[...], wh_repaired_by,
                             preferred_element_type=f32)           # -> crew
    ft_repairing = jnp.dot(adj_rep_ref[...], wh_repairing,
                           preferred_element_type=f32)             # -> plane
    ft_p_to = jnp.dot(adj_p_to_ref[...], wh_p_to, preferred_element_type=f32)
    ft_s_to = jnp.dot(adj_s_to_ref[...], wh_s_to, preferred_element_type=f32)
    # TODO(synk): ft_s_in / ft_v_to are computed by the PyTorch module but never
    # used in the output combine, so they are intentionally not computed here.

    # ---- combine + optional ReLU, single full-width store per node type ----------
    def act(x):
        return jnp.maximum(x, 0.0) if use_relu else x

    h_crew_ref[...] = act(wh_crew + ft_repaired_by)
    h_plane_ref[...] = act(wh_plane + ft_repairing)
    h_state_ref[...] = act(wh_s_in + ft_c_in + ft_p_in)
    h_value_ref[...] = act(wh_v_to + ft_p_to + ft_s_to)


def hetero_gat_forward(packed, feats, adjs, *, num_heads, out_dim,
                       l_alpha=0.2, use_relu=True):
    H = num_heads
    Nc, Np, Ns, Nv = (feats[t].shape[0] for t in ('crew', 'plane', 'state', 'value'))

    kern = functools.partial(
        _fused_hetgat_kernel,
        num_heads=H, d_state=out_dim['state'],
        hd_crew=H * out_dim['crew'], hd_plane=H * out_dim['plane'],
        hd_state=H * out_dim['state'], hd_value=H * out_dim['value'],
        alpha=l_alpha, use_relu=use_relu)

    out_shape = (
        jax.ShapeDtypeStruct((Nc, H * out_dim['crew']), jnp.float32),
        jax.ShapeDtypeStruct((Np, H * out_dim['plane']), jnp.float32),
        jax.ShapeDtypeStruct((Ns, H * out_dim['state']), jnp.float32),
        jax.ShapeDtypeStruct((Nv, H * out_dim['value']), jnp.float32),
    )
    vmem = pl.BlockSpec(memory_space=pltpu.MemorySpace.VMEM)
    inputs = (
        feats['crew'], feats['plane'], feats['state'], feats['value'],
        packed['w_crew'], packed['b_crew'], packed['w_plane'], packed['b_plane'],
        packed['w_state'], packed['b_state'], packed['w_value'], packed['b_value'],
        packed['a_c_src'], packed['a_c_dst'], packed['a_p_src'], packed['a_p_dst'],
        adjs['c_in'], adjs['p_in'], adjs['repairing'], adjs['repaired_by'],
        adjs['p_to'], adjs['s_to'],
    )
    h_crew, h_plane, h_state, h_value = pl.pallas_call(
        kern,
        out_shape=out_shape,
        in_specs=[vmem] * len(inputs),
        out_specs=(vmem, vmem, vmem, vmem),
    )(*inputs)

    return {
        'crew': h_crew.reshape(-1, H, out_dim['crew']),
        'plane': h_plane.reshape(-1, H, out_dim['plane']),
        'state': h_state.reshape(-1, H, out_dim['state']),
        'value': h_value.reshape(-1, H, out_dim['value']),
    }


# --------------------------------------------------------------------------- params

def init_params(key, in_dim, out_dim, num_heads):
    # fc[name]: nn.Linear(in_dim[src_type], out_dim[dst_type] * num_heads)
    fc_specs = {
        'crew': ('crew', 'crew'), 'plane': ('plane', 'plane'),
        'c_in': ('crew', 'state'), 'repairing': ('crew', 'plane'),
        'p_in': ('plane', 'state'), 'p_to': ('plane', 'value'),
        'repaired_by': ('plane', 'crew'), 's_in': ('state', 'state'),
        's_to': ('state', 'value'), 'v_to': ('value', 'value'),
    }
    params = {}
    for name, (src, dst) in fc_specs.items():
        key, kw, kb = jax.random.split(key, 3)
        din, dout = in_dim[src], out_dim[dst] * num_heads
        params[name + '_w'] = jax.random.normal(kw, (din, dout), jnp.float32) * 0.2
        params[name + '_b'] = jax.random.normal(kb, (1, dout), jnp.float32) * 0.05
    # attention vectors, shape (1, num_heads, out_dim['state']) kept flattened
    d = out_dim['state']
    gain = 2.0 ** 0.5                                     # calculate_gain('relu')
    std = gain * (2.0 / (num_heads * d + d)) ** 0.5        # xavier_normal
    for name in ('c_in_src', 'c_in_dst', 'p_in_src', 'p_in_dst'):
        key, k = jax.random.split(key)
        params[name] = jax.random.normal(k, (1, num_heads * d), jnp.float32) * std
    return params


def pack_params(params, *, num_heads, out_dim):
    """One-time host-side packing: concat per-source weights, build block-diag attn."""
    H, Ds = num_heads, out_dim['state']

    def blkdiag(a_flat):
        a = a_flat.reshape(H, Ds)                      # [H, Ds]
        eye = jnp.eye(H, dtype=jnp.float32)            # [H, H]
        return (a[:, :, None] * eye[:, None, :]).reshape(H * Ds, H)

    cat = lambda names, sfx: jnp.concatenate([params[n + sfx] for n in names], axis=1)
    crew_names = ('crew', 'c_in', 'repairing')
    plane_names = ('plane', 'p_in', 'p_to', 'repaired_by')
    state_names = ('s_in', 's_to')
    return {
        'w_crew': cat(crew_names, '_w'), 'b_crew': cat(crew_names, '_b'),
        'w_plane': cat(plane_names, '_w'), 'b_plane': cat(plane_names, '_b'),
        'w_state': cat(state_names, '_w'), 'b_state': cat(state_names, '_b'),
        'w_value': params['v_to_w'], 'b_value': params['v_to_b'],
        'a_c_src': blkdiag(params['c_in_src']), 'a_c_dst': blkdiag(params['c_in_dst']),
        'a_p_src': blkdiag(params['p_in_src']), 'a_p_dst': blkdiag(params['p_in_dst']),
    }


# --------------------------------------------------------------------------- pure-JAX reference

def reference_forward(params, feats, adjs, *, num_heads, out_dim,
                      l_alpha=0.2, use_relu=True):
    H = num_heads

    def lin(name, x):
        return x @ params[name + '_w'] + params[name + '_b']

    def gat_ref(wh_src, wh_dst, a_src, a_dst, adj, d):
        ns, nd = wh_src.shape[0], wh_dst.shape[0]
        ws = wh_src.reshape(ns, H, d)
        wd = wh_dst.reshape(nd, H, d)
        asrc = (ws * a_src.reshape(1, H, d)).sum(-1)          # [Ns, H]
        adst = (wd * a_dst.reshape(1, H, d)).sum(-1)          # [Nd, H]
        e = adst[:, None, :] + asrc[None, :, :]               # [Nd, Ns, H]
        e = jnp.where(e >= 0, e, l_alpha * e)
        mask = (adj > 0)[:, :, None]
        e = jnp.where(mask, e, -1e30)
        m = e.max(axis=1, keepdims=True)
        p = jnp.where(mask, jnp.exp(e - m), 0.0)
        denom = p.sum(axis=1, keepdims=True)
        attn = p / jnp.where(denom > 0, denom, 1.0)
        return jnp.einsum('dsh,shf->dhf', attn, ws).reshape(nd, H * d)

    Wh = {n: lin(n, feats[s]) for n, s in [
        ('crew', 'crew'), ('plane', 'plane'), ('c_in', 'crew'),
        ('repairing', 'crew'), ('p_in', 'plane'), ('p_to', 'plane'),
        ('repaired_by', 'plane'), ('s_in', 'state'), ('s_to', 'state'),
        ('v_to', 'value')]}

    ft_c_in = gat_ref(Wh['c_in'], Wh['s_in'], params['c_in_src'],
                      params['c_in_dst'], adjs['c_in'], out_dim['state'])
    ft_p_in = gat_ref(Wh['p_in'], Wh['s_in'], params['p_in_src'],
                      params['p_in_dst'], adjs['p_in'], out_dim['state'])

    def act(x):
        return jnp.maximum(x, 0.0) if use_relu else x

    h_crew = act(Wh['crew'] + adjs['repaired_by'] @ Wh['repaired_by'])
    h_plane = act(Wh['plane'] + adjs['repairing'] @ Wh['repairing'])
    h_state = act(Wh['s_in'] + ft_c_in + ft_p_in)
    h_value = act(Wh['v_to'] + adjs['p_to'] @ Wh['p_to'] + adjs['s_to'] @ Wh['s_to'])
    return {
        'crew': h_crew.reshape(-1, H, out_dim['crew']),
        'plane': h_plane.reshape(-1, H, out_dim['plane']),
        'state': h_state.reshape(-1, H, out_dim['state']),
        'value': h_value.reshape(-1, H, out_dim['value']),
    }


# --------------------------------------------------------------------------- main

if __name__ == "__main__":
    in_dim = {'crew': 6, 'plane': 7, 'state': 5, 'value': 4}
    out_dim = {'crew': 8, 'plane': 6, 'state': 8, 'value': 4}
    num_heads = 4
    Nc, Np, Ns, Nv = 3, 4, 2, 1

    key = jax.random.PRNGKey(0)
    key, kc, kp, ks, kv, kparam = jax.random.split(key, 6)
    feats = {
        'crew': jax.random.normal(kc, (Nc, in_dim['crew']), jnp.float32),
        'plane': jax.random.normal(kp, (Np, in_dim['plane']), jnp.float32),
        'state': jax.random.normal(ks, (Ns, in_dim['state']), jnp.float32),
        'value': jax.random.normal(kv, (Nv, in_dim['value']), jnp.float32),
    }
    params = init_params(kparam, in_dim, out_dim, num_heads)
    packed = pack_params(params, num_heads=num_heads, out_dim=out_dim)

    # Dense adjacency matrices adj[dst, src] (0/1) for each edge type.
    adjs = {
        'c_in': jnp.array([[1., 0., 1.], [1., 1., 0.]], jnp.float32),            # crew -> state
        'p_in': jnp.array([[1., 1., 0., 0.], [0., 1., 1., 1.]], jnp.float32),    # plane -> state
        'repairing': jnp.array([[1., 0., 0.], [0., 1., 0.],
                                [0., 0., 1.], [1., 0., 0.]], jnp.float32),        # crew -> plane
        'repaired_by': jnp.array([[1., 0., 0., 1.], [0., 1., 0., 0.],
                                  [0., 0., 1., 0.]], jnp.float32),                # plane -> crew
        'p_to': jnp.array([[1., 1., 1., 1.]], jnp.float32),                       # plane -> value
        's_to': jnp.array([[1., 1.]], jnp.float32),                               # state -> value
    }

    out = hetero_gat_forward(packed, feats, adjs,
                             num_heads=num_heads, out_dim=out_dim,
                             l_alpha=0.2, use_relu=True)
    out = jax.tree_util.tree_map(lambda x: x.block_until_ready(), out)

    ref = reference_forward(params, feats, adjs,
                            num_heads=num_heads, out_dim=out_dim,
                            l_alpha=0.2, use_relu=True)
    for ntype in ('crew', 'plane', 'state', 'value'):
        assert out[ntype].shape == ref[ntype].shape, ntype
        assert jnp.allclose(out[ntype], ref[ntype], atol=1e-4, rtol=1e-4), ntype

    print("KERNEL_OK")
</pallas_src>

<mosaic_0001>
module attributes {stable_mosaic.version = 11 : i64} {
  func.func @_fused_hetgat_kernel(%arg0: memref<3x6xf32, #tpu.memory_space<vmem>>, %arg1: memref<4x7xf32, #tpu.memory_space<vmem>>, %arg2: memref<2x5xf32, #tpu.memory_space<vmem>>, %arg3: memref<1x4xf32, #tpu.memory_space<vmem>>, %arg4: memref<6x88xf32, #tpu.memory_space<vmem>>, %arg5: memref<1x88xf32, #tpu.memory_space<vmem>>, %arg6: memref<7x104xf32, #tpu.memory_space<vmem>>, %arg7: memref<1x104xf32, #tpu.memory_space<vmem>>, %arg8: memref<5x48xf32, #tpu.memory_space<vmem>>, %arg9: memref<1x48xf32, #tpu.memory_space<vmem>>, %arg10: memref<4x16xf32, #tpu.memory_space<vmem>>, %arg11: memref<1x16xf32, #tpu.memory_space<vmem>>, %arg12: memref<32x4xf32, #tpu.memory_space<vmem>>, %arg13: memref<32x4xf32, #tpu.memory_space<vmem>>, %arg14: memref<32x4xf32, #tpu.memory_space<vmem>>, %arg15: memref<32x4xf32, #tpu.memory_space<vmem>>, %arg16: memref<2x3xf32, #tpu.memory_space<vmem>>, %arg17: memref<2x4xf32, #tpu.memory_space<vmem>>, %arg18: memref<4x3xf32, #tpu.memory_space<vmem>>, %arg19: memref<3x4xf32, #tpu.memory_space<vmem>>, %arg20: memref<1x4xf32, #tpu.memory_space<vmem>>, %arg21: memref<1x2xf32, #tpu.memory_space<vmem>>, %arg22: memref<3x32xf32, #tpu.memory_space<vmem>>, %arg23: memref<4x24xf32, #tpu.memory_space<vmem>>, %arg24: memref<2x32xf32, #tpu.memory_space<vmem>>, %arg25: memref<1x16xf32, #tpu.memory_space<vmem>>) attributes {dimension_semantics = [], scalar_prefetch = 0 : i64, scratch_operands = 0 : i64, tpu.core_type = #tpu.core_type<tc>} {
    %c0 = arith.constant 0 : index
    %c0_0 = arith.constant 0 : index
    %0 = vector.load %arg0[%c0, %c0_0] : memref<3x6xf32, #tpu.memory_space<vmem>>, vector<3x6xf32>
    %c0_1 = arith.constant 0 : index
    %c0_2 = arith.constant 0 : index
    %1 = vector.load %arg4[%c0_1, %c0_2] : memref<6x88xf32, #tpu.memory_space<vmem>>, vector<6x88xf32>
    %cst = arith.constant dense<0.000000e+00> : vector<3x88xf32>
    %2 = tpu.matmul %0, %1, %cst {dimension_numbers = #tpu.dot_dimension_numbers<[1], [0], [0], [1], [0, 0, 1, 1], [], []>} : vector<3x6xf32>, vector<6x88xf32>, vector<3x88xf32> -> vector<3x88xf32>
    %c0_3 = arith.constant 0 : index
    %c0_4 = arith.constant 0 : index
    %3 = vector.load %arg5[%c0_3, %c0_4] : memref<1x88xf32, #tpu.memory_space<vmem>>, vector<1x88xf32>
    %4 = vector.broadcast %3 : vector<1x88xf32> to vector<3x88xf32>
    %5 = arith.addf %2, %4 : vector<3x88xf32>
    %c0_5 = arith.constant 0 : index
    %c0_6 = arith.constant 0 : index
    %6 = vector.load %arg1[%c0_5, %c0_6] : memref<4x7xf32, #tpu.memory_space<vmem>>, vector<4x7xf32>
    %c0_7 = arith.constant 0 : index
    %c0_8 = arith.constant 0 : index
    %7 = vector.load %arg6[%c0_7, %c0_8] : memref<7x104xf32, #tpu.memory_space<vmem>>, vector<7x104xf32>
    %cst_9 = arith.constant dense<0.000000e+00> : vector<4x104xf32>
    %8 = tpu.matmul %6, %7, %cst_9 {dimension_numbers = #tpu.dot_dimension_numbers<[1], [0], [0], [1], [0, 0, 1, 1], [], []>} : vector<4x7xf32>, vector<7x104xf32>, vector<4x104xf32> -> vector<4x104xf32>
    %c0_10 = arith.constant 0 : index
    %c0_11 = arith.constant 0 : index
    %9 = vector.load %arg7[%c0_10, %c0_11] : memref<1x104xf32, #tpu.memory_space<vmem>>, vector<1x104xf32>
    %10 = vector.broadcast %9 : vector<1x104xf32> to vector<4x104xf32>
    %11 = arith.addf %8, %10 : vector<4x104xf32>
    %c0_12 = arith.constant 0 : index
    %c0_13 = arith.constant 0 : index
    %12 = vector.load %arg2[%c0_12, %c0_13] : memref<2x5xf32, #tpu.memory_space<vmem>>, vector<2x5xf32>
    %c0_14 = arith.constant 0 : index
    %c0_15 = arith.constant 0 : index
    %13 = vector.load %arg8[%c0_14, %c0_15] : memref<5x48xf32, #tpu.memory_space<vmem>>, vector<5x48xf32>
    %cst_16 = arith.constant dense<0.000000e+00> : vector<2x48xf32>
    %14 = tpu.matmul %12, %13, %cst_16 {dimension_numbers = #tpu.dot_dimension_numbers<[1], [0], [0], [1], [0, 0, 1, 1], [], []>} : vector<2x5xf32>, vector<5x48xf32>, vector<2x48xf32> -> vector<2x48xf32>
    %c0_17 = arith.constant 0 : index
    %c0_18 = arith.constant 0 : index
    %15 = vector.load %arg9[%c0_17, %c0_18] : memref<1x48xf32, #tpu.memory_space<vmem>>, vector<1x48xf32>
    %16 = vector.broadcast %15 : vector<1x48xf32> to vector<2x48xf32>
    %17 = arith.addf %14, %16 : vector<2x48xf32>
    %c0_19 = arith.constant 0 : index
    %c0_20 = arith.constant 0 : index
    %18 = vector.load %arg3[%c0_19, %c0_20] : memref<1x4xf32, #tpu.memory_space<vmem>>, vector<1x4xf32>
    %c0_21 = arith.constant 0 : index
    %c0_22 = arith.constant 0 : index
    %19 = vector.load %arg10[%c0_21, %c0_22] : memref<4x16xf32, #tpu.memory_space<vmem>>, vector<4x16xf32>
    %cst_23 = arith.constant dense<0.000000e+00> : vector<1x16xf32>
    %20 = tpu.matmul %18, %19, %cst_23 {dimension_numbers = #tpu.dot_dimension_numbers<[1], [0], [0], [1], [0, 0, 1, 1], [], []>} : vector<1x4xf32>, vector<4x16xf32>, vector<1x16xf32> -> vector<1x16xf32>
    %c0_24 = arith.constant 0 : index
    %c0_25 = arith.constant 0 : index
    %21 = vector.load %arg11[%c0_24, %c0_25] : memref<1x16xf32, #tpu.memory_space<vmem>>, vector<1x16xf32>
    %22 = arith.addf %20, %21 : vector<1x16xf32>
    %23 = vector.extract_strided_slice %5 {offsets = [0, 0], sizes = [3, 32], strides = [1, 1]} : vector<3x88xf32> to vector<3x32xf32>
    %24 = vector.extract_strided_slice %5 {offsets = [0, 32], sizes = [3, 32], strides = [1, 1]} : vector<3x88xf32> to vector<3x32xf32>
    %25 = vector.extract_strided_slice %5 {offsets = [0, 64], sizes = [3, 24], strides = [1, 1]} : vector<3x88xf32> to vector<3x24xf32>
    %26 = vector.extract_strided_slice %11 {offsets = [0, 0], sizes = [4, 24], strides = [1, 1]} : vector<4x104xf32> to vector<4x24xf32>
    %27 = vector.extract_strided_slice %11 {offsets = [0, 24], sizes = [4, 32], strides = [1, 1]} : vector<4x104xf32> to vector<4x32xf32>
    %28 = vector.extract_strided_slice %11 {offsets = [0, 56], sizes = [4, 16], strides = [1, 1]} : vector<4x104xf32> to vector<4x16xf32>
    %29 = vector.extract_strided_slice %11 {offsets = [0, 72], sizes = [4, 32], strides = [1, 1]} : vector<4x104xf32> to vector<4x32xf32>
    %30 = vector.extract_strided_slice %17 {offsets = [0, 0], sizes = [2, 32], strides = [1, 1]} : vector<2x48xf32> to vector<2x32xf32>
    %31 = vector.extract_strided_slice %17 {offsets = [0, 32], sizes = [2, 16], strides = [1, 1]} : vector<2x48xf32> to vector<2x16xf32>
    %c0_26 = arith.constant 0 : index
    %c0_27 = arith.constant 0 : index
    %32 = vector.load %arg12[%c0_26, %c0_27] : memref<32x4xf32, #tpu.memory_space<vmem>>, vector<32x4xf32>
    %c0_28 = arith.constant 0 : index
    %c0_29 = arith.constant 0 : index
    %33 = vector.load %arg13[%c0_28, %c0_29] : memref<32x4xf32, #tpu.memory_space<vmem>>, vector<32x4xf32>
    %c0_30 = arith.constant 0 : index
    %c0_31 = arith.constant 0 : index
    %34 = vector.load %arg16[%c0_30, %c0_31] : memref<2x3xf32, #tpu.memory_space<vmem>>, vector<2x3xf32>
    %cst_32 = arith.constant 0.000000e+00 : f32
    %35 = vector.broadcast %cst_32 : f32 to vector<2x3xf32>
    %36 = arith.cmpf ogt, %34, %35 : vector<2x3xf32>
    %cst_33 = arith.constant dense<0.000000e+00> : vector<4x3xf32>
    %37 = tpu.matmul %32, %24, %cst_33 {dimension_numbers = #tpu.dot_dimension_numbers<[0], [1], [1], [0], [0, 1, 1, 0], [], []>} : vector<32x4xf32>, vector<3x32xf32>, vector<4x3xf32> -> vector<4x3xf32>
    %cst_34 = arith.constant dense<0.000000e+00> : vector<2x4xf32>
    %38 = tpu.matmul %30, %33, %cst_34 {dimension_numbers = #tpu.dot_dimension_numbers<[1], [0], [0], [1], [0, 0, 1, 1], [], []>} : vector<2x32xf32>, vector<32x4xf32>, vector<2x4xf32> -> vector<2x4xf32>
    %39 = vector.extract_strided_slice %38 {offsets = [0, 0], sizes = [2, 1], strides = [1, 1]} : vector<2x4xf32> to vector<2x1xf32>
    %40 = vector.extract_strided_slice %37 {offsets = [0, 0], sizes = [1, 3], strides = [1, 1]} : vector<4x3xf32> to vector<1x3xf32>
    %41 = vector.broadcast %39 : vector<2x1xf32> to vector<2x3xf32>
    %42 = vector.broadcast %40 : vector<1x3xf32> to vector<2x3xf32>
    %43 = arith.addf %41, %42 : vector<2x3xf32>
    %cst_35 = arith.constant 0.000000e+00 : f32
    %44 = vector.broadcast %cst_35 : f32 to vector<2x3xf32>
    %45 = arith.cmpf oge, %43, %44 : vector<2x3xf32>
    %cst_36 = arith.constant 2.000000e-01 : f32
    %46 = vector.broadcast %cst_36 : f32 to vector<2x3xf32>
    %47 = arith.mulf %46, %43 : vector<2x3xf32>
    %48 = arith.select %45, %43, %47 : vector<2x3xi1>, vector<2x3xf32>
    %cst_37 = arith.constant -1.000000e+30 : f32
    %49 = vector.broadcast %cst_37 : f32 to vector<2x3xf32>
    %50 = arith.select %36, %48, %49 : vector<2x3xi1>, vector<2x3xf32>
    %cst_38 = arith.constant dense<0xFF800000> : vector<2xf32>
    %51 = vector.multi_reduction <maximumf>, %50, %cst_38 [1] : vector<2x3xf32> to vector<2xf32>
    %52 = vector.shape_cast %51 : vector<2xf32> to vector<2x1xf32>
    %53 = vector.broadcast %52 : vector<2x1xf32> to vector<2x3xf32>
    %54 = arith.subf %50, %53 : vector<2x3xf32>
    %55 = math.exp %54 : vector<2x3xf32>
    %cst_39 = arith.constant 0.000000e+00 : f32
    %56 = vector.broadcast %cst_39 : f32 to vector<2x3xf32>
    %57 = arith.select %36, %55, %56 : vector<2x3xi1>, vector<2x3xf32>
    %cst_40 = arith.constant dense<0.000000e+00> : vector<2xf32>
    %58 = vector.multi_reduction <add>, %57, %cst_40 [1] : vector<2x3xf32> to vector<2xf32>
    %59 = vector.shape_cast %58 : vector<2xf32> to vector<2x1xf32>
    %cst_41 = arith.constant 0.000000e+00 : f32
    %60 = vector.broadcast %cst_41 : f32 to vector<2x1xf32>
    %61 = arith.cmpf ogt, %59, %60 : vector<2x1xf32>
    %cst_42 = arith.constant 1.000000e+00 : f32
    %62 = vector.broadcast %cst_42 : f32 to vector<2x1xf32>
    %63 = arith.select %61, %59, %62 : vector<2x1xi1>, vector<2x1xf32>
    %64 = vector.broadcast %63 : vector<2x1xf32> to vector<2x3xf32>
    %65 = arith.divf %57, %64 : vector<2x3xf32>
    %66 = vector.extract_strided_slice %24 {offsets = [0, 0], sizes = [3, 8], strides = [1, 1]} : vector<3x32xf32> to vector<3x8xf32>
    %cst_43 = arith.constant dense<0.000000e+00> : vector<2x8xf32>
    %67 = tpu.matmul %65, %66, %cst_43 {dimension_numbers = #tpu.dot_dimension_numbers<[1], [0], [0], [1], [0, 0, 1, 1], [], []>} : vector<2x3xf32>, vector<3x8xf32>, vector<2x8xf32> -> vector<2x8xf32>
    %68 = vector.extract_strided_slice %38 {offsets = [0, 1], sizes = [2, 1], strides = [1, 1]} : vector<2x4xf32> to vector<2x1xf32>
    %69 = vector.extract_strided_slice %37 {offsets = [1, 0], sizes = [1, 3], strides = [1, 1]} : vector<4x3xf32> to vector<1x3xf32>
    %70 = vector.broadcast %68 : vector<2x1xf32> to vector<2x3xf32>
    %71 = vector.broadcast %69 : vector<1x3xf32> to vector<2x3xf32>
    %72 = arith.addf %70, %71 : vector<2x3xf32>
    %cst_44 = arith.constant 0.000000e+00 : f32
    %73 = vector.broadcast %cst_44 : f32 to vector<2x3xf32>
    %74 = arith.cmpf oge, %72, %73 : vector<2x3xf32>
    %cst_45 = arith.constant 2.000000e-01 : f32
    %75 = vector.broadcast %cst_45 : f32 to vector<2x3xf32>
    %76 = arith.mulf %75, %72 : vector<2x3xf32>
    %77 = arith.select %74, %72, %76 : vector<2x3xi1>, vector<2x3xf32>
    %cst_46 = arith.constant -1.000000e+30 : f32
    %78 = vector.broadcast %cst_46 : f32 to vector<2x3xf32>
    %79 = arith.select %36, %77, %78 : vector<2x3xi1>, vector<2x3xf32>
    %cst_47 = arith.constant dense<0xFF800000> : vector<2xf32>
    %80 = vector.multi_reduction <maximumf>, %79, %cst_47 [1] : vector<2x3xf32> to vector<2xf32>
    %81 = vector.shape_cast %80 : vector<2xf32> to vector<2x1xf32>
    %82 = vector.broadcast %81 : vector<2x1xf32> to vector<2x3xf32>
    %83 = arith.subf %79, %82 : vector<2x3xf32>
    %84 = math.exp %83 : vector<2x3xf32>
    %cst_48 = arith.constant 0.000000e+00 : f32
    %85 = vector.broadcast %cst_48 : f32 to vector<2x3xf32>
    %86 = arith.select %36, %84, %85 : vector<2x3xi1>, vector<2x3xf32>
    %cst_49 = arith.constant dense<0.000000e+00> : vector<2xf32>
    %87 = vector.multi_reduction <add>, %86, %cst_49 [1] : vector<2x3xf32> to vector<2xf32>
    %88 = vector.shape_cast %87 : vector<2xf32> to vector<2x1xf32>
    %cst_50 = arith.constant 0.000000e+00 : f32
    %89 = vector.broadcast %cst_50 : f32 to vector<2x1xf32>
    %90 = arith.cmpf ogt, %88, %89 : vector<2x1xf32>
    %cst_51 = arith.constant 1.000000e+00 : f32
    %91 = vector.broadcast %cst_51 : f32 to vector<2x1xf32>
    %92 = arith.select %90, %88, %91 : vector<2x1xi1>, vector<2x1xf32>
    %93 = vector.broadcast %92 : vector<2x1xf32> to vector<2x3xf32>
    %94 = arith.divf %86, %93 : vector<2x3xf32>
    %95 = vector.extract_strided_slice %24 {offsets = [0, 8], sizes = [3, 8], strides = [1, 1]} : vector<3x32xf32> to vector<3x8xf32>
    %cst_52 = arith.constant dense<0.000000e+00> : vector<2x8xf32>
    %96 = tpu.matmul %94, %95, %cst_52 {dimension_numbers = #tpu.dot_dimension_numbers<[1], [0], [0], [1], [0, 0, 1, 1], [], []>} : vector<2x3xf32>, vector<3x8xf32>, vector<2x8xf32> -> vector<2x8xf32>
    %97 = vector.extract_strided_slice %38 {offsets = [0, 2], sizes = [2, 1], strides = [1, 1]} : vector<2x4xf32> to vector<2x1xf32>
    %98 = vector.extract_strided_slice %37 {offsets = [2, 0], sizes = [1, 3], strides = [1, 1]} : vector<4x3xf32> to vector<1x3xf32>
    %99 = vector.broadcast %97 : vector<2x1xf32> to vector<2x3xf32>
    %100 = vector.broadcast %98 : vector<1x3xf32> to vector<2x3xf32>
    %101 = arith.addf %99, %100 : vector<2x3xf32>
    %cst_53 = arith.constant 0.000000e+00 : f32
    %102 = vector.broadcast %cst_53 : f32 to vector<2x3xf32>
    %103 = arith.cmpf oge, %101, %102 : vector<2x3xf32>
    %cst_54 = arith.constant 2.000000e-01 : f32
    %104 = vector.broadcast %cst_54 : f32 to vector<2x3xf32>
    %105 = arith.mulf %104, %101 : vector<2x3xf32>
    %106 = arith.select %103, %101, %105 : vector<2x3xi1>, vector<2x3xf32>
    %cst_55 = arith.constant -1.000000e+30 : f32
    %107 = vector.broadcast %cst_55 : f32 to vector<2x3xf32>
    %108 = arith.select %36, %106, %107 : vector<2x3xi1>, vector<2x3xf32>
    %cst_56 = arith.constant dense<0xFF800000> : vector<2xf32>
    %109 = vector.multi_reduction <maximumf>, %108, %cst_56 [1] : vector<2x3xf32> to vector<2xf32>
    %110 = vector.shape_cast %109 : vector<2xf32> to vector<2x1xf32>
    %111 = vector.broadcast %110 : vector<2x1xf32> to vector<2x3xf32>
    %112 = arith.subf %108, %111 : vector<2x3xf32>
    %113 = math.exp %112 : vector<2x3xf32>
    %cst_57 = arith.constant 0.000000e+00 : f32
    %114 = vector.broadcast %cst_57 : f32 to vector<2x3xf32>
    %115 = arith.select %36, %113, %114 : vector<2x3xi1>, vector<2x3xf32>
    %cst_58 = arith.constant dense<0.000000e+00> : vector<2xf32>
    %116 = vector.multi_reduction <add>, %115, %cst_58 [1] : vector<2x3xf32> to vector<2xf32>
    %117 = vector.shape_cast %116 : vector<2xf32> to vector<2x1xf32>
    %cst_59 = arith.constant 0.000000e+00 : f32
    %118 = vector.broadcast %cst_59 : f32 to vector<2x1xf32>
    %119 = arith.cmpf ogt, %117, %118 : vector<2x1xf32>
    %cst_60 = arith.constant 1.000000e+00 : f32
    %120 = vector.broadcast %cst_60 : f32 to vector<2x1xf32>
    %121 = arith.select %119, %117, %120 : vector<2x1xi1>, vector<2x1xf32>
    %122 = vector.broadcast %121 : vector<2x1xf32> to vector<2x3xf32>
    %123 = arith.divf %115, %122 : vector<2x3xf32>
    %124 = vector.extract_strided_slice %24 {offsets = [0, 16], sizes = [3, 8], strides = [1, 1]} : vector<3x32xf32> to vector<3x8xf32>
    %cst_61 = arith.constant dense<0.000000e+00> : vector<2x8xf32>
    %125 = tpu.matmul %123, %124, %cst_61 {dimension_numbers = #tpu.dot_dimension_numbers<[1], [0], [0], [1], [0, 0, 1, 1], [], []>} : vector<2x3xf32>, vector<3x8xf32>, vector<2x8xf32> -> vector<2x8xf32>
    %126 = vector.extract_strided_slice %38 {offsets = [0, 3], sizes = [2, 1], strides = [1, 1]} : vector<2x4xf32> to vector<2x1xf32>
    %127 = vector.extract_strided_slice %37 {offsets = [3, 0], sizes = [1, 3], strides = [1, 1]} : vector<4x3xf32> to vector<1x3xf32>
    %128 = vector.broadcast %126 : vector<2x1xf32> to vector<2x3xf32>
    %129 = vector.broadcast %127 : vector<1x3xf32> to vector<2x3xf32>
    %130 = arith.addf %128, %129 : vector<2x3xf32>
    %cst_62 = arith.constant 0.000000e+00 : f32
    %131 = vector.broadcast %cst_62 : f32 to vector<2x3xf32>
    %132 = arith.cmpf oge, %130, %131 : vector<2x3xf32>
    %cst_63 = arith.constant 2.000000e-01 : f32
    %133 = vector.broadcast %cst_63 : f32 to vector<2x3xf32>
    %134 = arith.mulf %133, %130 : vector<2x3xf32>
    %135 = arith.select %132, %130, %134 : vector<2x3xi1>, vector<2x3xf32>
    %cst_64 = arith.constant -1.000000e+30 : f32
    %136 = vector.broadcast %cst_64 : f32 to vector<2x3xf32>
    %137 = arith.select %36, %135, %136 : vector<2x3xi1>, vector<2x3xf32>
    %cst_65 = arith.constant dense<0xFF800000> : vector<2xf32>
    %138 = vector.multi_reduction <maximumf>, %137, %cst_65 [1] : vector<2x3xf32> to vector<2xf32>
    %139 = vector.shape_cast %138 : vector<2xf32> to vector<2x1xf32>
    %140 = vector.broadcast %139 : vector<2x1xf32> to vector<2x3xf32>
    %141 = arith.subf %137, %140 : vector<2x3xf32>
    %142 = math.exp %141 : vector<2x3xf32>
    %cst_66 = arith.constant 0.000000e+00 : f32
    %143 = vector.broadcast %cst_66 : f32 to vector<2x3xf32>
    %144 = arith.select %36, %142, %143 : vector<2x3xi1>, vector<2x3xf32>
    %cst_67 = arith.constant dense<0.000000e+00> : vector<2xf32>
    %145 = vector.multi_reduction <add>, %144, %cst_67 [1] : vector<2x3xf32> to vector<2xf32>
    %146 = vector.shape_cast %145 : vector<2xf32> to vector<2x1xf32>
    %cst_68 = arith.constant 0.000000e+00 : f32
    %147 = vector.broadcast %cst_68 : f32 to vector<2x1xf32>
    %148 = arith.cmpf ogt, %146, %147 : vector<2x1xf32>
    %cst_69 = arith.constant 1.000000e+00 : f32
    %149 = vector.broadcast %cst_69 : f32 to vector<2x1xf32>
    %150 = arith.select %148, %146, %149 : vector<2x1xi1>, vector<2x1xf32>
    %151 = vector.broadcast %150 : vector<2x1xf32> to vector<2x3xf32>
    %152 = arith.divf %144, %151 : vector<2x3xf32>
    %153 = vector.extract_strided_slice %24 {offsets = [0, 24], sizes = [3, 8], strides = [1, 1]} : vector<3x32xf32> to vector<3x8xf32>
    %cst_70 = arith.constant dense<0.000000e+00> : vector<2x8xf32>
    %154 = tpu.matmul %152, %153, %cst_70 {dimension_numbers = #tpu.dot_dimension_numbers<[1], [0], [0], [1], [0, 0, 1, 1], [], []>} : vector<2x3xf32>, vector<3x8xf32>, vector<2x8xf32> -> vector<2x8xf32>
    %155 = tpu.concatenate %67, %96, %125, %154 in 1 : vector<2x8xf32>, vector<2x8xf32>, vector<2x8xf32>, vector<2x8xf32> -> vector<2x32xf32>
    %c0_71 = arith.constant 0 : index
    %c0_72 = arith.constant 0 : index
    %156 = vector.load %arg14[%c0_71, %c0_72] : memref<32x4xf32, #tpu.memory_space<vmem>>, vector<32x4xf32>
    %c0_73 = arith.constant 0 : index
    %c0_74 = arith.constant 0 : index
    %157 = vector.load %arg15[%c0_73, %c0_74] : memref<32x4xf32, #tpu.memory_space<vmem>>, vector<32x4xf32>
    %c0_75 = arith.constant 0 : index
    %c0_76 = arith.constant 0 : index
    %158 = vector.load %arg17[%c0_75, %c0_76] : memref<2x4xf32, #tpu.memory_space<vmem>>, vector<2x4xf32>
    %cst_77 = arith.constant 0.000000e+00 : f32
    %159 = vector.broadcast %cst_77 : f32 to vector<2x4xf32>
    %160 = arith.cmpf ogt, %158, %159 : vector<2x4xf32>
    %cst_78 = arith.constant dense<0.000000e+00> : vector<4x4xf32>
    %161 = tpu.matmul %156, %27, %cst_78 {dimension_numbers = #tpu.dot_dimension_numbers<[0], [1], [1], [0], [0, 1, 1, 0], [], []>} : vector<32x4xf32>, vector<4x32xf32>, vector<4x4xf32> -> vector<4x4xf32>
    %cst_79 = arith.constant dense<0.000000e+00> : vector<2x4xf32>
    %162 = tpu.matmul %30, %157, %cst_79 {dimension_numbers = #tpu.dot_dimension_numbers<[1], [0], [0], [1], [0, 0, 1, 1], [], []>} : vector<2x32xf32>, vector<32x4xf32>, vector<2x4xf32> -> vector<2x4xf32>
    %163 = vector.extract_strided_slice %162 {offsets = [0, 0], sizes = [2, 1], strides = [1, 1]} : vector<2x4xf32> to vector<2x1xf32>
    %164 = vector.extract_strided_slice %161 {offsets = [0, 0], sizes = [1, 4], strides = [1, 1]} : vector<4x4xf32> to vector<1x4xf32>
    %165 = vector.broadcast %163 : vector<2x1xf32> to vector<2x4xf32>
    %166 = vector.broadcast %164 : vector<1x4xf32> to vector<2x4xf32>
    %167 = arith.addf %165, %166 : vector<2x4xf32>
    %cst_80 = arith.constant 0.000000e+00 : f32
    %168 = vector.broadcast %cst_80 : f32 to vector<2x4xf32>
    %169 = arith.cmpf oge, %167, %168 : vector<2x4xf32>
    %cst_81 = arith.constant 2.000000e-01 : f32
    %170 = vector.broadcast %cst_81 : f32 to vector<2x4xf32>
    %171 = arith.mulf %170, %167 : vector<2x4xf32>
    %172 = arith.select %169, %167, %171 : vector<2x4xi1>, vector<2x4xf32>
    %cst_82 = arith.constant -1.000000e+30 : f32
    %173 = vector.broadcast %cst_82 : f32 to vector<2x4xf32>
    %174 = arith.select %160, %172, %173 : vector<2x4xi1>, vector<2x4xf32>
    %cst_83 = arith.constant dense<0xFF800000> : vector<2xf32>
    %175 = vector.multi_reduction <maximumf>, %174, %cst_83 [1] : vector<2x4xf32> to vector<2xf32>
    %176 = vector.shape_cast %175 : vector<2xf32> to vector<2x1xf32>
    %177 = vector.broadcast %176 : vector<2x1xf32> to vector<2x4xf32>
    %178 = arith.subf %174, %177 : vector<2x4xf32>
    %179 = math.exp %178 : vector<2x4xf32>
    %cst_84 = arith.constant 0.000000e+00 : f32
    %180 = vector.broadcast %cst_84 : f32 to vector<2x4xf32>
    %181 = arith.select %160, %179, %180 : vector<2x4xi1>, vector<2x4xf32>
    %cst_85 = arith.constant dense<0.000000e+00> : vector<2xf32>
    %182 = vector.multi_reduction <add>, %181, %cst_85 [1] : vector<2x4xf32> to vector<2xf32>
    %183 = vector.shape_cast %182 : vector<2xf32> to vector<2x1xf32>
    %cst_86 = arith.constant 0.000000e+00 : f32
    %184 = vector.broadcast %cst_86 : f32 to vector<2x1xf32>
    %185 = arith.cmpf ogt, %183, %184 : vector<2x1xf32>
    %cst_87 = arith.constant 1.000000e+00 : f32
    %186 = vector.broadcast %cst_87 : f32 to vector<2x1xf32>
    %187 = arith.select %185, %183, %186 : vector<2x1xi1>, vector<2x1xf32>
    %188 = vector.broadcast %187 : vector<2x1xf32> to vector<2x4xf32>
    %189 = arith.divf %181, %188 : vector<2x4xf32>
    %190 = vector.extract_strided_slice %27 {offsets = [0, 0], sizes = [4, 8], strides = [1, 1]} : vector<4x32xf32> to vector<4x8xf32>
    %cst_88 = arith.constant dense<0.000000e+00> : vector<2x8xf32>
    %191 = tpu.matmul %189, %190, %cst_88 {dimension_numbers = #tpu.dot_dimension_numbers<[1], [0], [0], [1], [0, 0, 1, 1], [], []>} : vector<2x4xf32>, vector<4x8xf32>, vector<2x8xf32> -> vector<2x8xf32>
    %192 = vector.extract_strided_slice %162 {offsets = [0, 1], sizes = [2, 1], strides = [1, 1]} : vector<2x4xf32> to vector<2x1xf32>
    %193 = vector.extract_strided_slice %161 {offsets = [1, 0], sizes = [1, 4], strides = [1, 1]} : vector<4x4xf32> to vector<1x4xf32>
    %194 = vector.broadcast %192 : vector<2x1xf32> to vector<2x4xf32>
    %195 = vector.broadcast %193 : vector<1x4xf32> to vector<2x4xf32>
    %196 = arith.addf %194, %195 : vector<2x4xf32>
    %cst_89 = arith.constant 0.000000e+00 : f32
    %197 = vector.broadcast %cst_89 : f32 to vector<2x4xf32>
    %198 = arith.cmpf oge, %196, %197 : vector<2x4xf32>
    %cst_90 = arith.constant 2.000000e-01 : f32
    %199 = vector.broadcast %cst_90 : f32 to vector<2x4xf32>
    %200 = arith.mulf %199, %196 : vector<2x4xf32>
    %201 = arith.select %198, %196, %200 : vector<2x4xi1>, vector<2x4xf32>
    %cst_91 = arith.constant -1.000000e+30 : f32
    %202 = vector.broadcast %cst_91 : f32 to vector<2x4xf32>
    %203 = arith.select %160, %201, %202 : vector<2x4xi1>, vector<2x4xf32>
    %cst_92 = arith.constant dense<0xFF800000> : vector<2xf32>
    %204 = vector.multi_reduction <maximumf>, %203, %cst_92 [1] : vector<2x4xf32> to vector<2xf32>
    %205 = vector.shape_cast %204 : vector<2xf32> to vector<2x1xf32>
    %206 = vector.broadcast %205 : vector<2x1xf32> to vector<2x4xf32>
    %207 = arith.subf %203, %206 : vector<2x4xf32>
    %208 = math.exp %207 : vector<2x4xf32>
    %cst_93 = arith.constant 0.000000e+00 : f32
    %209 = vector.broadcast %cst_93 : f32 to vector<2x4xf32>
    %210 = arith.select %160, %208, %209 : vector<2x4xi1>, vector<2x4xf32>
    %cst_94 = arith.constant dense<0.000000e+00> : vector<2xf32>
    %211 = vector.multi_reduction <add>, %210, %cst_94 [1] : vector<2x4xf32> to vector<2xf32>
    %212 = vector.shape_cast %211 : vector<2xf32> to vector<2x1xf32>
    %cst_95 = arith.constant 0.000000e+00 : f32
    %213 = vector.broadcast %cst_95 : f32 to vector<2x1xf32>
    %214 = arith.cmpf ogt, %212, %213 : vector<2x1xf32>
    %cst_96 = arith.constant 1.000000e+00 : f32
    %215 = vector.broadcast %cst_96 : f32 to vector<2x1xf32>
    %216 = arith.select %214, %212, %215 : vector<2x1xi1>, vector<2x1xf32>
    %217 = vector.broadcast %216 : vector<2x1xf32> to vector<2x4xf32>
    %218 = arith.divf %210, %217 : vector<2x4xf32>
    %219 = vector.extract_strided_slice %27 {offsets = [0, 8], sizes = [4, 8], strides = [1, 1]} : vector<4x32xf32> to vector<4x8xf32>
    %cst_97 = arith.constant dense<0.000000e+00> : vector<2x8xf32>
    %220 = tpu.matmul %218, %219, %cst_97 {dimension_numbers = #tpu.dot_dimension_numbers<[1], [0], [0], [1], [0, 0, 1, 1], [], []>} : vector<2x4xf32>, vector<4x8xf32>, vector<2x8xf32> -> vector<2x8xf32>
    %221 = vector.extract_strided_slice %162 {offsets = [0, 2], sizes = [2, 1], strides = [1, 1]} : vector<2x4xf32> to vector<2x1xf32>
    %222 = vector.extract_strided_slice %161 {offsets = [2, 0], sizes = [1, 4], strides = [1, 1]} : vector<4x4xf32> to vector<1x4xf32>
    %223 = vector.broadcast %221 : vector<2x1xf32> to vector<2x4xf32>
    %224 = vector.broadcast %222 : vector<1x4xf32> to vector<2x4xf32>
    %225 = arith.addf %223, %224 : vector<2x4xf32>
    %cst_98 = arith.constant 0.000000e+00 : f32
    %226 = vector.broadcast %cst_98 : f32 to vector<2x4xf32>
    %227 = arith.cmpf oge, %225, %226 : vector<2x4xf32>
    %cst_99 = arith.constant 2.000000e-01 : f32
    %228 = vector.broadcast %cst_99 : f32 to vector<2x4xf32>
    %229 = arith.mulf %228, %225 : vector<2x4xf32>
    %230 = arith.select %227, %225, %229 : vector<2x4xi1>, vector<2x4xf32>
    %cst_100 = arith.constant -1.000000e+30 : f32
    %231 = vector.broadcast %cst_100 : f32 to vector<2x4xf32>
    %232 = arith.select %160, %230, %231 : vector<2x4xi1>, vector<2x4xf32>
    %cst_101 = arith.constant dense<0xFF800000> : vector<2xf32>
    %233 = vector.multi_reduction <maximumf>, %232, %cst_101 [1] : vector<2x4xf32> to vector<2xf32>
    %234 = vector.shape_cast %233 : vector<2xf32> to vector<2x1xf32>
    %235 = vector.broadcast %234 : vector<2x1xf32> to vector<2x4xf32>
    %236 = arith.subf %232, %235 : vector<2x4xf32>
    %237 = math.exp %236 : vector<2x4xf32>
    %cst_102 = arith.constant 0.000000e+00 : f32
    %238 = vector.broadcast %cst_102 : f32 to vector<2x4xf32>
    %239 = arith.select %160, %237, %238 : vector<2x4xi1>, vector<2x4xf32>
    %cst_103 = arith.constant dense<0.000000e+00> : vector<2xf32>
    %240 = vector.multi_reduction <add>, %239, %cst_103 [1] : vector<2x4xf32> to vector<2xf32>
    %241 = vector.shape_cast %240 : vector<2xf32> to vector<2x1xf32>
    %cst_104 = arith.constant 0.000000e+00 : f32
    %242 = vector.broadcast %cst_104 : f32 to vector<2x1xf32>
    %243 = arith.cmpf ogt, %241, %242 : vector<2x1xf32>
    %cst_105 = arith.constant 1.000000e+00 : f32
    %244 = vector.broadcast %cst_105 : f32 to vector<2x1xf32>
    %245 = arith.select %243, %241, %244 : vector<2x1xi1>, vector<2x1xf32>
    %246 = vector.broadcast %245 : vector<2x1xf32> to vector<2x4xf32>
    %247 = arith.divf %239, %246 : vector<2x4xf32>
    %248 = vector.extract_strided_slice %27 {offsets = [0, 16], sizes = [4, 8], strides = [1, 1]} : vector<4x32xf32> to vector<4x8xf32>
    %cst_106 = arith.constant dense<0.000000e+00> : vector<2x8xf32>
    %249 = tpu.matmul %247, %248, %cst_106 {dimension_numbers = #tpu.dot_dimension_numbers<[1], [0], [0], [1], [0, 0, 1, 1], [], []>} : vector<2x4xf32>, vector<4x8xf32>, vector<2x8xf32> -> vector<2x8xf32>
    %250 = vector.extract_strided_slice %162 {offsets = [0, 3], sizes = [2, 1], strides = [1, 1]} : vector<2x4xf32> to vector<2x1xf32>
    %251 = vector.extract_strided_slice %161 {offsets = [3, 0], sizes = [1, 4], strides = [1, 1]} : vector<4x4xf32> to vector<1x4xf32>
    %252 = vector.broadcast %250 : vector<2x1xf32> to vector<2x4xf32>
    %253 = vector.broadcast %251 : vector<1x4xf32> to vector<2x4xf32>
    %254 = arith.addf %252, %253 : vector<2x4xf32>
    %cst_107 = arith.constant 0.000000e+00 : f32
    %255 = vector.broadcast %cst_107 : f32 to vector<2x4xf32>
    %256 = arith.cmpf oge, %254, %255 : vector<2x4xf32>
    %cst_108 = arith.constant 2.000000e-01 : f32
    %257 = vector.broadcast %cst_108 : f32 to vector<2x4xf32>
    %258 = arith.mulf %257, %254 : vector<2x4xf32>
    %259 = arith.select %256, %254, %258 : vector<2x4xi1>, vector<2x4xf32>
    %cst_109 = arith.constant -1.000000e+30 : f32
    %260 = vector.broadcast %cst_109 : f32 to vector<2x4xf32>
    %261 = arith.select %160, %259, %260 : vector<2x4xi1>, vector<2x4xf32>
    %cst_110 = arith.constant dense<0xFF800000> : vector<2xf32>
    %262 = vector.multi_reduction <maximumf>, %261, %cst_110 [1] : vector<2x4xf32> to vector<2xf32>
    %263 = vector.shape_cast %262 : vector<2xf32> to vector<2x1xf32>
    %264 = vector.broadcast %263 : vector<2x1xf32> to vector<2x4xf32>
    %265 = arith.subf %261, %264 : vector<2x4xf32>
    %266 = math.exp %265 : vector<2x4xf32>
    %cst_111 = arith.constant 0.000000e+00 : f32
    %267 = vector.broadcast %cst_111 : f32 to vector<2x4xf32>
    %268 = arith.select %160, %266, %267 : vector<2x4xi1>, vector<2x4xf32>
    %cst_112 = arith.constant dense<0.000000e+00> : vector<2xf32>
    %269 = vector.multi_reduction <add>, %268, %cst_112 [1] : vector<2x4xf32> to vector<2xf32>
    %270 = vector.shape_cast %269 : vector<2xf32> to vector<2x1xf32>
    %cst_113 = arith.constant 0.000000e+00 : f32
    %271 = vector.broadcast %cst_113 : f32 to vector<2x1xf32>
    %272 = arith.cmpf ogt, %270, %271 : vector<2x1xf32>
    %cst_114 = arith.constant 1.000000e+00 : f32
    %273 = vector.broadcast %cst_114 : f32 to vector<2x1xf32>
    %274 = arith.select %272, %270, %273 : vector<2x1xi1>, vector<2x1xf32>
    %275 = vector.broadcast %274 : vector<2x1xf32> to vector<2x4xf32>
    %276 = arith.divf %268, %275 : vector<2x4xf32>
    %277 = vector.extract_strided_slice %27 {offsets = [0, 24], sizes = [4, 8], strides = [1, 1]} : vector<4x32xf32> to vector<4x8xf32>
    %cst_115 = arith.constant dense<0.000000e+00> : vector<2x8xf32>
    %278 = tpu.matmul %276, %277, %cst_115 {dimension_numbers = #tpu.dot_dimension_numbers<[1], [0], [0], [1], [0, 0, 1, 1], [], []>} : vector<2x4xf32>, vector<4x8xf32>, vector<2x8xf32> -> vector<2x8xf32>
    %279 = tpu.concatenate %191, %220, %249, %278 in 1 : vector<2x8xf32>, vector<2x8xf32>, vector<2x8xf32>, vector<2x8xf32> -> vector<2x32xf32>
    %c0_116 = arith.constant 0 : index
    %c0_117 = arith.constant 0 : index
    %280 = vector.load %arg19[%c0_116, %c0_117] : memref<3x4xf32, #tpu.memory_space<vmem>>, vector<3x4xf32>
    %cst_118 = arith.constant dense<0.000000e+00> : vector<3x32xf32>
    %281 = tpu.matmul %280, %29, %cst_118 {dimension_numbers = #tpu.dot_dimension_numbers<[1], [0], [0], [1], [0, 0, 1, 1], [], []>} : vector<3x4xf32>, vector<4x32xf32>, vector<3x32xf32> -> vector<3x32xf32>
    %c0_119 = arith.constant 0 : index
    %c0_120 = arith.constant 0 : index
    %282 = vector.load %arg18[%c0_119, %c0_120] : memref<4x3xf32, #tpu.memory_space<vmem>>, vector<4x3xf32>
    %cst_121 = arith.constant dense<0.000000e+00> : vector<4x24xf32>
    %283 = tpu.matmul %282, %25, %cst_121 {dimension_numbers = #tpu.dot_dimension_numbers<[1], [0], [0], [1], [0, 0, 1, 1], [], []>} : vector<4x3xf32>, vector<3x24xf32>, vector<4x24xf32> -> vector<4x24xf32>
    %c0_122 = arith.constant 0 : index
    %c0_123 = arith.constant 0 : index
    %284 = vector.load %arg20[%c0_122, %c0_123] : memref<1x4xf32, #tpu.memory_space<vmem>>, vector<1x4xf32>
    %cst_124 = arith.constant dense<0.000000e+00> : vector<1x16xf32>
    %285 = tpu.matmul %284, %28, %cst_124 {dimension_numbers = #tpu.dot_dimension_numbers<[1], [0], [0], [1], [0, 0, 1, 1], [], []>} : vector<1x4xf32>, vector<4x16xf32>, vector<1x16xf32> -> vector<1x16xf32>
    %c0_125 = arith.constant 0 : index
    %c0_126 = arith.constant 0 : index
    %286 = vector.load %arg21[%c0_125, %c0_126] : memref<1x2xf32, #tpu.memory_space<vmem>>, vector<1x2xf32>
    %cst_127 = arith.constant dense<0.000000e+00> : vector<1x16xf32>
    %287 = tpu.matmul %286, %31, %cst_127 {dimension_numbers = #tpu.dot_dimension_numbers<[1], [0], [0], [1], [0, 0, 1, 1], [], []>} : vector<1x2xf32>, vector<2x16xf32>, vector<1x16xf32> -> vector<1x16xf32>
    %288 = arith.addf %23, %281 : vector<3x32xf32>
    %cst_128 = arith.constant 0.000000e+00 : f32
    %289 = vector.broadcast %cst_128 : f32 to vector<3x32xf32>
    %290 = arith.maximumf %288, %289 : vector<3x32xf32>
    %c0_129 = arith.constant 0 : index
    %c0_130 = arith.constant 0 : index
    %291 = vector.load %arg22[%c0_129, %c0_130] : memref<3x32xf32, #tpu.memory_space<vmem>>, vector<3x32xf32>
    tpu.vector_store %arg22[%c0_129, %c0_130], %290 {strides = array<i32>} : memref<3x32xf32, #tpu.memory_space<vmem>>, vector<3x32xf32>,
    %292 = arith.addf %26, %283 : vector<4x24xf32>
    %cst_131 = arith.constant 0.000000e+00 : f32
    %293 = vector.broadcast %cst_131 : f32 to vector<4x24xf32>
    %294 = arith.maximumf %292, %293 : vector<4x24xf32>
    %c0_132 = arith.constant 0 : index
    %c0_133 = arith.constant 0 : index
    %295 = vector.load %arg23[%c0_132, %c0_133] : memref<4x24xf32, #tpu.memory_space<vmem>>, vector<4x24xf32>
    tpu.vector_store %arg23[%c0_132, %c0_133], %294 {strides = array<i32>} : memref<4x24xf32, #tpu.memory_space<vmem>>, vector<4x24xf32>,
    %296 = arith.addf %30, %155 : vector<2x32xf32>
    %297 = arith.addf %296, %279 : vector<2x32xf32>
    %cst_134 = arith.constant 0.000000e+00 : f32
    %298 = vector.broadcast %cst_134 : f32 to vector<2x32xf32>
    %299 = arith.maximumf %297, %298 : vector<2x32xf32>
    %c0_135 = arith.constant 0 : index
    %c0_136 = arith.constant 0 : index
    %300 = vector.load %arg24[%c0_135, %c0_136] : memref<2x32xf32, #tpu.memory_space<vmem>>, vector<2x32xf32>
    tpu.vector_store %arg24[%c0_135, %c0_136], %299 {strides = array<i32>} : memref<2x32xf32, #tpu.memory_space<vmem>>, vector<2x32xf32>,
    %301 = arith.addf %22, %285 : vector<1x16xf32>
    %302 = arith.addf %301, %287 : vector<1x16xf32>
    %cst_137 = arith.constant 0.000000e+00 : f32
    %303 = vector.broadcast %cst_137 : f32 to vector<1x16xf32>
    %304 = arith.maximumf %302, %303 : vector<1x16xf32>
    %c0_138 = arith.constant 0 : index
    %c0_139 = arith.constant 0 : index
    %305 = vector.load %arg25[%c0_138, %c0_139] : memref<1x16xf32, #tpu.memory_space<vmem>>, vector<1x16xf32>
    tpu.vector_store %arg25[%c0_138, %c0_139], %304 {strides = array<i32>} : memref<1x16xf32, #tpu.memory_space<vmem>>, vector<1x16xf32>,
    return
  }
}

</mosaic_0001>

<llo_original>
// kernel: tpu_custom_call.1
$region0: #{tpu_custom_call.1}
  #allocation0 [shape = 'u32[]', space=smem, size = 0x4, offset = 0x4, fixed_abs, tag = 'smem constant byte address 0x4 - core index']
  #allocation1 [shape = 'u32[144,128]{1,0:T(1,128)}', space=vmem, size = 0x12000, scoped, tag = 'internal scratch']
  %s0 = inlined_call_operand.vmem [shape: f32[3,6], index: 0, kind: input, shape index: {}]
  %s1 = inlined_call_operand.vmem [shape: f32[4,7], index: 1, kind: input, shape index: {}]
  %s2 = inlined_call_operand.vmem [shape: f32[2,5], index: 2, kind: input, shape index: {}]
  %s3 = inlined_call_operand.vmem [shape: f32[1,4], index: 3, kind: input, shape index: {}]
  %s4 = inlined_call_operand.vmem [shape: f32[6,88], index: 4, kind: input, shape index: {}]
  %s5 = inlined_call_operand.vmem [shape: f32[1,88], index: 5, kind: input, shape index: {}]
  %s6 = inlined_call_operand.vmem [shape: f32[7,104], index: 6, kind: input, shape index: {}]
  %s7 = inlined_call_operand.vmem [shape: f32[1,104], index: 7, kind: input, shape index: {}]
  %s8 = inlined_call_operand.vmem [shape: f32[5,48], index: 8, kind: input, shape index: {}]
  %s9 = inlined_call_operand.vmem [shape: f32[1,48], index: 9, kind: input, shape index: {}]
  %s10 = inlined_call_operand.vmem [shape: f32[4,16], index: 10, kind: input, shape index: {}]
  %s11 = inlined_call_operand.vmem [shape: f32[1,16], index: 11, kind: input, shape index: {}]
  %s12 = inlined_call_operand.vmem [shape: f32[32,4], index: 12, kind: input, shape index: {}]
  %s13 = inlined_call_operand.vmem [shape: f32[32,4], index: 13, kind: input, shape index: {}]
  %s14 = inlined_call_operand.vmem [shape: f32[32,4], index: 14, kind: input, shape index: {}]
  %s15 = inlined_call_operand.vmem [shape: f32[32,4], index: 15, kind: input, shape index: {}]
  %s16 = inlined_call_operand.vmem [shape: f32[2,3], index: 16, kind: input, shape index: {}]
  %s17 = inlined_call_operand.vmem [shape: f32[2,4], index: 17, kind: input, shape index: {}]
  %s18 = inlined_call_operand.vmem [shape: f32[4,3], index: 18, kind: input, shape index: {}]
  %s19 = inlined_call_operand.vmem [shape: f32[3,4], index: 19, kind: input, shape index: {}]
  %s20 = inlined_call_operand.vmem [shape: f32[1,4], index: 20, kind: input, shape index: {}]
  %s21 = inlined_call_operand.vmem [shape: f32[1,2], index: 21, kind: input, shape index: {}]
  %s22 = inlined_call_operand.hbm [shape: f32[3,32], index: 22, kind: output, shape index: {0}]
  %s23 = inlined_call_operand.hbm [shape: f32[4,24], index: 23, kind: output, shape index: {1}]
  %s24 = inlined_call_operand.hbm [shape: f32[2,32], index: 24, kind: output, shape index: {2}]
  %s25 = inlined_call_operand.hbm [shape: f32[1,16], index: 25, kind: output, shape index: {3}]
  %26 = xla_tuple %s22, %s23, %s24, %s25
  %s27 = sld [smem:[#allocation0]]
  $region122: #{tpu_custom_call.1} parent=0
    _
  %s29 = ssub.s32 1, %s27
  %s30 = scalar_select 0, %s29, %s27
  $region1: #{tpu_custom_call.1} parent=0
    #allocation2 [shape = 'u8[2048]{0}', space=vmem, size = 0x800, scoped, tag = 'output window, operand 0, single buffered']
    #allocation3 [shape = 's32[1]{0}', space=sflag, size = 0x4, scoped, tag = 'scoped memory for tpu_custom_call.1']
    #allocation4 [shape = 'u8[2048]{0}', space=vmem, size = 0x800, scoped, tag = 'output window, operand 1, single buffered']
    #allocation5 [shape = 's32[1]{0}', space=sflag, size = 0x4, scoped, tag = 'scoped memory for tpu_custom_call.1']
    #allocation6 [shape = 'u8[1024]{0}', space=vmem, size = 0x400, scoped, tag = 'output window, operand 2, single buffered']
    #allocation7 [shape = 'u8[512]{0}', space=vmem, size = 0x400, scoped, tag = 'output window, operand 3, single buffered']
    #allocation8 [shape = 's32[1]{0}', space=sflag, size = 0x4, scoped, tag = 'scoped memory for tpu_custom_call.1']
    %31 = vsyncpa [#allocation3], 0
    %32 = vsyncpa [#allocation5], 0
    %33 = vsyncpa [#allocation8], 0
    // Predicated region
    $region2: #{tpu_custom_call.1} parent=1 // pred_check
      _
    $region3: #{tpu_custom_call.1} parent=1 // pred_check_branch
      %35 = sbr.rel (0) target = $region5
    $region4: #{tpu_custom_call.1} parent=1 // pred_region
      _
    $region5: #{tpu_custom_call.1} parent=1 // pred_fallthru
      _
    // Predicated region
    $region6: #{tpu_custom_call.1} parent=1 // pred_check
      _
    $region7: #{tpu_custom_call.1} parent=1 // pred_check_branch
      %37 = sbr.rel (0) target = $region9
    $region8: #{tpu_custom_call.1} parent=1 // pred_region
      _
    $region9: #{tpu_custom_call.1} parent=1 // pred_fallthru
      _
    // Predicated region
    $region10: #{tpu_custom_call.1} parent=1 // pred_check
      _
    $region11: #{tpu_custom_call.1} parent=1 // pred_check_branch
      %39 = sbr.rel (0) target = $region13
    $region12: #{tpu_custom_call.1} parent=1 // pred_region
      _
    $region13: #{tpu_custom_call.1} parent=1 // pred_fallthru
      _
    // Predicated region
    $region14: #{tpu_custom_call.1} parent=1 // pred_check
      _
    $region15: #{tpu_custom_call.1} parent=1 // pred_check_branch
      %41 = sbr.rel (0) target = $region17
    $region16: #{tpu_custom_call.1} parent=1 // pred_region
      _
    $region17: #{tpu_custom_call.1} parent=1 // pred_fallthru
      _
    // Predicated region
    $region18: #{tpu_custom_call.1} parent=1 // pred_check
      _
    $region19: #{tpu_custom_call.1} parent=1 // pred_check_branch
      %43 = sbr.rel (0) target = $region21
    $region20: #{tpu_custom_call.1} parent=1 // pred_region
      _
    $region21: #{tpu_custom_call.1} parent=1 // pred_fallthru
      _
    // Predicated region
    $region22: #{tpu_custom_call.1} parent=1 // pred_check
      _
    $region23: #{tpu_custom_call.1} parent=1 // pred_check_branch
      %45 = sbr.rel (0) target = $region25
    $region24: #{tpu_custom_call.1} parent=1 // pred_region
      _
    $region25: #{tpu_custom_call.1} parent=1 // pred_fallthru
      _
    // Predicated region
    $region26: #{tpu_custom_call.1} parent=1 // pred_check
      _
    $region27: #{tpu_custom_call.1} parent=1 // pred_check_branch
      %47 = sbr.rel (0) target = $region29
    $region28: #{tpu_custom_call.1} parent=1 // pred_region
      _
    $region29: #{tpu_custom_call.1} parent=1 // pred_fallthru
      _
    // Predicated region
    $region30: #{tpu_custom_call.1} parent=1 // pred_check
      _
    $region31: #{tpu_custom_call.1} parent=1 // pred_check_branch
      %49 = sbr.rel (0) target = $region33
    $region32: #{tpu_custom_call.1} parent=1 // pred_region
      _
    $region33: #{tpu_custom_call.1} parent=1 // pred_fallthru
      _
    // Predicated region
    $region34: #{tpu_custom_call.1} parent=1 // pred_check
      _
    $region35: #{tpu_custom_call.1} parent=1 // pred_check_branch
      %51 = sbr.rel (0) target = $region37
    $region36: #{tpu_custom_call.1} parent=1 // pred_region
      _
    $region37: #{tpu_custom_call.1} parent=1 // pred_fallthru
      _
    // Predicated region
    $region38: #{tpu_custom_call.1} parent=1 // pred_check
      _
    $region39: #{tpu_custom_call.1} parent=1 // pred_check_branch
      %53 = sbr.rel (0) target = $region41
    $region40: #{tpu_custom_call.1} parent=1 // pred_region
      _
    $region41: #{tpu_custom_call.1} parent=1 // pred_fallthru
      _
    // Predicated region
    $region42: #{tpu_custom_call.1} parent=1 // pred_check
      _
    $region43: #{tpu_custom_call.1} parent=1 // pred_check_branch
      %55 = sbr.rel (0) target = $region45
    $region44: #{tpu_custom_call.1} parent=1 // pred_region
      _
    $region45: #{tpu_custom_call.1} parent=1 // pred_fallthru
      _
    // Predicated region
    $region46: #{tpu_custom_call.1} parent=1 // pred_check
      _
    $region47: #{tpu_custom_call.1} parent=1 // pred_check_branch
      %57 = sbr.rel (0) target = $region49
    $region48: #{tpu_custom_call.1} parent=1 // pred_region
      _
    $region49: #{tpu_custom_call.1} parent=1 // pred_fallthru
      _
    // Predicated region
    $region50: #{tpu_custom_call.1} parent=1 // pred_check
      _
    $region51: #{tpu_custom_call.1} parent=1 // pred_check_branch
      %59 = sbr.rel (0) target = $region53
    $region52: #{tpu_custom_call.1} parent=1 // pred_region
      _
    $region53: #{tpu_custom_call.1} parent=1 // pred_fallthru
      _
    // Predicated region
    $region54: #{tpu_custom_call.1} parent=1 // pred_check
      _
    $region55: #{tpu_custom_call.1} parent=1 // pred_check_branch
      %61 = sbr.rel (0) target = $region57
    $region56: #{tpu_custom_call.1} parent=1 // pred_region
      _
    $region57: #{tpu_custom_call.1} parent=1 // pred_fallthru
      _
    // Predicated region
    $region58: #{tpu_custom_call.1} parent=1 // pred_check
      _
    $region59: #{tpu_custom_call.1} parent=1 // pred_check_branch
      %63 = sbr.rel (0) target = $region61
    $region60: #{tpu_custom_call.1} parent=1 // pred_region
      _
    $region61: #{tpu_custom_call.1} parent=1 // pred_fallthru
      _
    // Predicated region
    $region62: #{tpu_custom_call.1} parent=1 // pred_check
      _
    $region63: #{tpu_custom_call.1} parent=1 // pred_check_branch
      %65 = sbr.rel (0) target = $region65
    $region64: #{tpu_custom_call.1} parent=1 // pred_region
      _
    $region65: #{tpu_custom_call.1} parent=1 // pred_fallthru
      _
    // Predicated region
    $region66: #{tpu_custom_call.1} parent=1 // pred_check
      _
    $region67: #{tpu_custom_call.1} parent=1 // pred_check_branch
      %67 = sbr.rel (0) target = $region69
    $region68: #{tpu_custom_call.1} parent=1 // pred_region
      _
    $region69: #{tpu_custom_call.1} parent=1 // pred_fallthru
      _
    // Predicated region
    $region70: #{tpu_custom_call.1} parent=1 // pred_check
      _
    $region71: #{tpu_custom_call.1} parent=1 // pred_check_branch
      %69 = sbr.rel (0) target = $region73
    $region72: #{tpu_custom_call.1} parent=1 // pred_region
      _
    $region73: #{tpu_custom_call.1} parent=1 // pred_fallthru
      _
    // Predicated region
    $region74: #{tpu_custom_call.1} parent=1 // pred_check
      _
    $region75: #{tpu_custom_call.1} parent=1 // pred_check_branch
      %71 = sbr.rel (0) target = $region77
    $region76: #{tpu_custom_call.1} parent=1 // pred_region
      _
    $region77: #{tpu_custom_call.1} parent=1 // pred_fallthru
      _
    // Predicated region
    $region78: #{tpu_custom_call.1} parent=1 // pred_check
      _
    $region79: #{tpu_custom_call.1} parent=1 // pred_check_branch
      %73 = sbr.rel (0) target = $region81
    $region80: #{tpu_custom_call.1} parent=1 // pred_region
      _
    $region81: #{tpu_custom_call.1} parent=1 // pred_fallthru
      _
    // Predicated region
    $region82: #{tpu_custom_call.1} parent=1 // pred_check
      _
    $region83: #{tpu_custom_call.1} parent=1 // pred_check_branch
      %75 = sbr.rel (0) target = $region85
    $region84: #{tpu_custom_call.1} parent=1 // pred_region
      _
    $region85: #{tpu_custom_call.1} parent=1 // pred_fallthru
      _
    // Predicated region
    $region86: #{tpu_custom_call.1} parent=1 // pred_check
      _
    $region87: #{tpu_custom_call.1} parent=1 // pred_check_branch
      %77 = sbr.rel (0) target = $region89
    $region88: #{tpu_custom_call.1} parent=1 // pred_region
      _
    $region89: #{tpu_custom_call.1} parent=1 // pred_fallthru
      _
    %v78 = vld [vmem:[%s0] sm:$0x7]
    %v79 = vld [vmem:[%s4] sm:$0x3f]
    %v80 = vld [vmem:[%s5] sm:$0x1]
    %v82 = vlaneseq
    %v83 = vshrl.u32 %v82, 7
    %v84 = vsub.s32 0, %v83
    %v85 = vrot.slane %v80, %v84
    %vm87 = vcmask 48128
    %v89 = vsel %vm87, %v78, 0
    %vm91 = vcmask 1045504
    %v93 = vsel %vm91, %v79, 0
    %95 = vmatprep.subr.mxu0 0.0
    %96 = vmatpush1.msra.mxu0 %v93
    %97 = vmatprep.subr.mxu0 0.0
    %98 = vmatpush1.msra.mxu0 0.0
    %99 = vmatprep.subr.mxu0 0.0
    %100 = vmatpush1.msra.mxu0 0.0
    %101 = vmatprep.subr.mxu0 0.0
    %102 = vmatpush1.msra.mxu0 0.0
    %103 = vmatprep.subr.mxu0 0.0
    %104 = vmatpush1.msra.mxu0 0.0
    %105 = vmatprep.subr.mxu0 0.0
    %106 = vmatpush1.msra.mxu0 0.0
    %107 = vmatprep.subr.mxu0 0.0
    %108 = vmatpush1.msra.mxu0 0.0
    %109 = vmatprep.subr.mxu0 0.0
    %110 = vmatpush1.msra.mxu0 0.0
    %111 = vmatprep.subr.mxu0 0.0
    %112 = vmatpush1.msra.mxu0 0.0
    %113 = vmatprep.subr.mxu0 0.0
    %114 = vmatpush1.msra.mxu0 0.0
    %115 = vmatprep.subr.mxu0 0.0
    %116 = vmatpush1.msra.mxu0 0.0
    %117 = vmatprep.subr.mxu0 0.0
    %118 = vmatpush1.msra.mxu0 0.0
    %119 = vmatprep.subr.mxu0 0.0
    %120 = vmatpush1.msra.mxu0 0.0
    %121 = vmatprep.subr.mxu0 0.0
    %122 = vmatpush1.msra.mxu0 0.0
    %123 = vmatprep.subr.mxu0 0.0
    %124 = vmatpush1.msra.mxu0 0.0
    %125 = vmatprep.subr.mxu0 0.0
    %126 = vmatpush1.msra.mxu0 0.0
    %127 = vmatprep.subr.mxu0 0.0
    %128 = vmatpush1.msra.mxu0 0.0
    %129 = vmatprep.subr.mxu0 0.0
    %130 = vmatpush1.msra.mxu0 0.0
    %131 = vmatprep.subr.mxu0 0.0
    %132 = vmatpush1.msra.mxu0 0.0
    %133 = vmatprep.subr.mxu0 0.0
    %134 = vmatpush1.msra.mxu0 0.0
    %135 = vmatprep.subr.mxu0 0.0
    %136 = vmatpush1.msra.mxu0 0.0
    %137 = vmatprep.subr.mxu0 0.0
    %138 = vmatpush1.msra.mxu0 0.0
    %139 = vmatprep.subr.mxu0 0.0
    %140 = vmatpush1.msra.mxu0 0.0
    %141 = vmatprep.subr.mxu0 0.0
    %142 = vmatpush1.msra.mxu0 0.0
    %143 = vmatprep.subr.mxu0 0.0
    %144 = vmatpush1.msra.mxu0 0.0
    %145 = vmatprep.subr.mxu0 0.0
    %146 = vmatpush1.msra.mxu0 0.0
    %147 = vmatprep.subr.mxu0 0.0
    %148 = vmatpush1.msra.mxu0 0.0
    %149 = vmatprep.subr.mxu0 0.0
    %150 = vmatpush1.msra.mxu0 0.0
    %151 = vmatprep.subr.mxu0 0.0
    %152 = vmatpush1.msra.mxu0 0.0
    %153 = vmatprep.subr.mxu0 0.0
    %154 = vmatpush1.msra.mxu0 0.0
    %155 = vmatprep.subr.mxu0 0.0
    %156 = vmatpush1.msra.mxu0 0.0
    %157 = vmatprep.subr.mxu0 0.0
    %158 = vmatpush1.msra.mxu0 0.0
    %159 = vmatprep.mubr.f32.mxu0 0.0
    %160 = vmatmul.mubr.f32.gmra.mrb[0].mxu0 %v89
    %v161 = vpop.f32.mrb[0].mxu0
    %v162 = vadd.f32 %v85, %v161
    %v163 = vpop.f32.mrb[0].mxu0
    %164 = vdwg.mxu0
    %v165 = vld [vmem:[%s1] sm:$0xf]
    %v166 = vld [vmem:[%s6] sm:$0x7f]
    %v167 = vld [vmem:[%s7] sm:$0x1]
    %v169 = vlaneseq
    %v170 = vshrl.u32 %v169, 7
    %v171 = vsub.s32 0, %v170
    %v172 = vrot.slane %v167, %v171
    %vm174 = vcmask 56320
    %v176 = vsel %vm174, %v165, 0
    %vm178 = vcmask 1046528
    %v180 = vsel %vm178, %v166, 0
    %182 = vmatprep.subr.mxu0 0.0
    %183 = vmatpush1.msra.mxu0 %v180
    %184 = vmatprep.subr.mxu0 0.0
    %185 = vmatpush1.msra.mxu0 0.0
    %186 = vmatprep.subr.mxu0 0.0
    %187 = vmatpush1.msra.mxu0 0.0
    %188 = vmatprep.subr.mxu0 0.0
    %189 = vmatpush1.msra.mxu0 0.0
    %190 = vmatprep.subr.mxu0 0.0
    %191 = vmatpush1.msra.mxu0 0.0
    %192 = vmatprep.subr.mxu0 0.0
    %193 = vmatpush1.msra.mxu0 0.0
    %194 = vmatprep.subr.mxu0 0.0
    %195 = vmatpush1.msra.mxu0 0.0
    %196 = vmatprep.subr.mxu0 0.0
    %197 = vmatpush1.msra.mxu0 0.0
    %198 = vmatprep.subr.mxu0 0.0
    %199 = vmatpush1.msra.mxu0 0.0
    %200 = vmatprep.subr.mxu0 0.0
    %201 = vmatpush1.msra.mxu0 0.0
    %202 = vmatprep.subr.mxu0 0.0
    %203 = vmatpush1.msra.mxu0 0.0
    %204 = vmatprep.subr.mxu0 0.0
    %205 = vmatpush1.msra.mxu0 0.0
    %206 = vmatprep.subr.mxu0 0.0
    %207 = vmatpush1.msra.mxu0 0.0
    %208 = vmatprep.subr.mxu0 0.0
    %209 = vmatpush1.msra.mxu0 0.0
    %210 = vmatprep.subr.mxu0 0.0
    %211 = vmatpush1.msra.mxu0 0.0
    %212 = vmatprep.subr.mxu0 0.0
    %213 = vmatpush1.msra.mxu0 0.0
    %214 = vmatprep.subr.mxu0 0.0
    %215 = vmatpush1.msra.mxu0 0.0
    %216 = vmatprep.subr.mxu0 0.0
    %217 = vmatpush1.msra.mxu0 0.0
    %218 = vmatprep.subr.mxu0 0.0
    %219 = vmatpush1.msra.mxu0 0.0
    %220 = vmatprep.subr.mxu0 0.0
    %221 = vmatpush1.msra.mxu0 0.0
    %222 = vmatprep.subr.mxu0 0.0
    %223 = vmatpush1.msra.mxu0 0.0
    %224 = vmatprep.subr.mxu0 0.0
    %225 = vmatpush1.msra.mxu0 0.0
    %226 = vmatprep.subr.mxu0 0.0
    %227 = vmatpush1.msra.mxu0 0.0
    %228 = vmatprep.subr.mxu0 0.0
    %229 = vmatpush1.msra.mxu0 0.0
    %230 = vmatprep.subr.mxu0 0.0
    %231 = vmatpush1.msra.mxu0 0.0
    %232 = vmatprep.subr.mxu0 0.0
    %233 = vmatpush1.msra.mxu0 0.0
    %234 = vmatprep.subr.mxu0 0.0
    %235 = vmatpush1.msra.mxu0 0.0
    %236 = vmatprep.subr.mxu0 0.0
    %237 = vmatpush1.msra.mxu0 0.0
    %238 = vmatprep.subr.mxu0 0.0
    %239 = vmatpush1.msra.mxu0 0.0
    %240 = vmatprep.subr.mxu0 0.0
    %241 = vmatpush1.msra.mxu0 0.0
    %242 = vmatprep.subr.mxu0 0.0
    %243 = vmatpush1.msra.mxu0 0.0
    %244 = vmatprep.subr.mxu0 0.0
    %245 = vmatpush1.msra.mxu0 0.0
    %246 = vmatprep.mubr.f32.mxu0 0.0
    %247 = vmatmul.mubr.f32.gmra.mrb[0].mxu0 %v176
    %v248 = vpop.f32.mrb[0].mxu0
    %v249 = vadd.f32 %v172, %v248
    %v250 = vpop.f32.mrb[0].mxu0
    %251 = vdwg.mxu0
    %v252 = vld [vmem:[%s2] sm:$0x3]
    %v253 = vld [vmem:[%s8] sm:$0x1f]
    %v254 = vld [vmem:[%s9] sm:$0x1]
    %v256 = vlaneseq
    %v257 = vshrl.u32 %v256, 7
    %v258 = vsub.s32 0, %v257
    %v259 = vrot.slane %v254, %v258
    %vm261 = vcmask 39936
    %v263 = vsel %vm261, %v252, 0
    %vm265 = vcmask 1044480
    %v267 = vsel %vm265, %v253, 0
    %269 = vmatprep.subr.mxu0 0.0
    %270 = vmatpush1.msra.mxu0 %v267
    %271 = vmatprep.subr.mxu0 0.0
    %272 = vmatpush1.msra.mxu0 0.0
    %273 = vmatprep.subr.mxu0 0.0
    %274 = vmatpush1.msra.mxu0 0.0
    %275 = vmatprep.subr.mxu0 0.0
    %276 = vmatpush1.msra.mxu0 0.0
    %277 = vmatprep.subr.mxu0 0.0
    %278 = vmatpush1.msra.mxu0 0.0
    %279 = vmatprep.subr.mxu0 0.0
    %280 = vmatpush1.msra.mxu0 0.0
    %281 = vmatprep.subr.mxu0 0.0
    %282 = vmatpush1.msra.mxu0 0.0
    %283 = vmatprep.subr.mxu0 0.0
    %284 = vmatpush1.msra.mxu0 0.0
    %285 = vmatprep.subr.mxu0 0.0
    %286 = vmatpush1.msra.mxu0 0.0
    %287 = vmatprep.subr.mxu0 0.0
    %288 = vmatpush1.msra.mxu0 0.0
    %289 = vmatprep.subr.mxu0 0.0
    %290 = vmatpush1.msra.mxu0 0.0
    %291 = vmatprep.subr.mxu0 0.0
    %292 = vmatpush1.msra.mxu0 0.0
    %293 = vmatprep.subr.mxu0 0.0
    %294 = vmatpush1.msra.mxu0 0.0
    %295 = vmatprep.subr.mxu0 0.0
    %296 = vmatpush1.msra.mxu0 0.0
    %297 = vmatprep.subr.mxu0 0.0
    %298 = vmatpush1.msra.mxu0 0.0
    %299 = vmatprep.subr.mxu0 0.0
    %300 = vmatpush1.msra.mxu0 0.0
    %301 = vmatprep.subr.mxu0 0.0
    %302 = vmatpush1.msra.mxu0 0.0
    %303 = vmatprep.subr.mxu0 0.0
    %304 = vmatpush1.msra.mxu0 0.0
    %305 = vmatprep.subr.mxu0 0.0
    %306 = vmatpush1.msra.mxu0 0.0
    %307 = vmatprep.subr.mxu0 0.0
    %308 = vmatpush1.msra.mxu0 0.0
    %309 = vmatprep.subr.mxu0 0.0
    %310 = vmatpush1.msra.mxu0 0.0
    %311 = vmatprep.subr.mxu0 0.0
    %312 = vmatpush1.msra.mxu0 0.0
    %313 = vmatprep.subr.mxu0 0.0
    %314 = vmatpush1.msra.mxu0 0.0
    %315 = vmatprep.subr.mxu0 0.0
    %316 = vmatpush1.msra.mxu0 0.0
    %317 = vmatprep.subr.mxu0 0.0
    %318 = vmatpush1.msra.mxu0 0.0
    %319 = vmatprep.subr.mxu0 0.0
    %320 = vmatpush1.msra.mxu0 0.0
    %321 = vmatprep.subr.mxu0 0.0
    %322 = vmatpush1.msra.mxu0 0.0
    %323 = vmatprep.subr.mxu0 0.0
    %324 = vmatpush1.msra.mxu0 0.0
    %325 = vmatprep.subr.mxu0 0.0
    %326 = vmatpush1.msra.mxu0 0.0
    %327 = vmatprep.subr.mxu0 0.0
    %328 = vmatpush1.msra.mxu0 0.0
    %329 = vmatprep.subr.mxu0 0.0
    %330 = vmatpush1.msra.mxu0 0.0
    %331 = vmatprep.subr.mxu0 0.0
    %332 = vmatpush1.msra.mxu0 0.0
    %333 = vmatprep.mubr.f32.mxu0 0.0
    %334 = vmatmul.mubr.f32.gmra.mrb[0].mxu0 %v263
    %v335 = vpop.f32.mrb[0].mxu0
    %v336 = vadd.f32 %v259, %v335
    %v337 = vpop.f32.mrb[0].mxu0
    %338 = vdwg.mxu0
    %v339 = vld [vmem:[%s3] sm:$0x1]
    %v340 = vld [vmem:[%s10] sm:$0xf]
    %v341 = vld [vmem:[%s11] sm:$0x1]
    %vm342 = vcmask 31744
    %v344 = vsel %vm342, %v339, 0
    %vm346 = vcmask 1043456
    %v348 = vsel %vm346, %v340, 0
    %350 = vmatprep.subr.mxu0 0.0
    %351 = vmatpush1.msra.mxu0 %v348
    %352 = vmatprep.subr.mxu0 0.0
    %353 = vmatpush1.msra.mxu0 0.0
    %354 = vmatprep.subr.mxu0 0.0
    %355 = vmatpush1.msra.mxu0 0.0
    %356 = vmatprep.subr.mxu0 0.0
    %357 = vmatpush1.msra.mxu0 0.0
    %358 = vmatprep.subr.mxu0 0.0
    %359 = vmatpush1.msra.mxu0 0.0
    %360 = vmatprep.subr.mxu0 0.0
    %361 = vmatpush1.msra.mxu0 0.0
    %362 = vmatprep.subr.mxu0 0.0
    %363 = vmatpush1.msra.mxu0 0.0
    %364 = vmatprep.subr.mxu0 0.0
    %365 = vmatpush1.msra.mxu0 0.0
    %366 = vmatprep.subr.mxu0 0.0
    %367 = vmatpush1.msra.mxu0 0.0
    %368 = vmatprep.subr.mxu0 0.0
    %369 = vmatpush1.msra.mxu0 0.0
    %370 = vmatprep.subr.mxu0 0.0
    %371 = vmatpush1.msra.mxu0 0.0
    %372 = vmatprep.subr.mxu0 0.0
    %373 = vmatpush1.msra.mxu0 0.0
    %374 = vmatprep.subr.mxu0 0.0
    %375 = vmatpush1.msra.mxu0 0.0
    %376 = vmatprep.subr.mxu0 0.0
    %377 = vmatpush1.msra.mxu0 0.0
    %378 = vmatprep.subr.mxu0 0.0
    %379 = vmatpush1.msra.mxu0 0.0
    %380 = vmatprep.subr.mxu0 0.0
    %381 = vmatpush1.msra.mxu0 0.0
    %382 = vmatprep.subr.mxu0 0.0
    %383 = vmatpush1.msra.mxu0 0.0
    %384 = vmatprep.subr.mxu0 0.0
    %385 = vmatpush1.msra.mxu0 0.0
    %386 = vmatprep.subr.mxu0 0.0
    %387 = vmatpush1.msra.mxu0 0.0
    %388 = vmatprep.subr.mxu0 0.0
    %389 = vmatpush1.msra.mxu0 0.0
    %390 = vmatprep.subr.mxu0 0.0
    %391 = vmatpush1.msra.mxu0 0.0
    %392 = vmatprep.subr.mxu0 0.0
    %393 = vmatpush1.msra.mxu0 0.0
    %394 = vmatprep.subr.mxu0 0.0
    %395 = vmatpush1.msra.mxu0 0.0
    %396 = vmatprep.subr.mxu0 0.0
    %397 = vmatpush1.msra.mxu0 0.0
    %398 = vmatprep.subr.mxu0 0.0
    %399 = vmatpush1.msra.mxu0 0.0
    %400 = vmatprep.subr.mxu0 0.0
    %401 = vmatpush1.msra.mxu0 0.0
    %402 = vmatprep.subr.mxu0 0.0
    %403 = vmatpush1.msra.mxu0 0.0
    %404 = vmatprep.subr.mxu0 0.0
    %405 = vmatpush1.msra.mxu0 0.0
    %406 = vmatprep.subr.mxu0 0.0
    %407 = vmatpush1.msra.mxu0 0.0
    %408 = vmatprep.subr.mxu0 0.0
    %409 = vmatpush1.msra.mxu0 0.0
    %410 = vmatprep.subr.mxu0 0.0
    %411 = vmatpush1.msra.mxu0 0.0
    %412 = vmatprep.subr.mxu0 0.0
    %413 = vmatpush1.msra.mxu0 0.0
    %414 = vmatprep.mubr.f32.mxu0 0.0
    %415 = vmatmul.mubr.f32.gmra.mrb[0].mxu0 %v344
    %v416 = vpop.f32.mrb[0].mxu0
    %v417 = vadd.f32 %v341, %v416
    %v418 = vpop.f32.mrb[0].mxu0
    %419 = vdwg.mxu0
    %v420 = vld [vmem:[%s12] sm:$0xff]
    %v421 = vld [vmem:[%s12 + $0x8] sm:$0xff]
    %v422 = vld [vmem:[%s12 + $0x10] sm:$0xff]
    %v423 = vld [vmem:[%s12 + $0x18] sm:$0xff]
    %v424 = vld [vmem:[%s13] sm:$0xff]
    %v425 = vld [vmem:[%s13 + $0x8] sm:$0xff]
    %v426 = vld [vmem:[%s13 + $0x10] sm:$0xff]
    %v427 = vld [vmem:[%s13 + $0x18] sm:$0xff]
    %v428 = vld [vmem:[%s16] sm:$0x3]
    %vm429 = vcmp.gt.f32.partialorder %v428, 0.0
    %430 = vxpose.xlu0.b32.start [1/16] %v420, 128
    %431 = vxpose.xlu0.b32.cont [2/16] %v421, 128
    %432 = vxpose.xlu0.b32.cont [3/16] %v422, 128
    %433 = vxpose.xlu0.b32.cont [4/16] %v423, 128
    %434 = vxpose.xlu0.b32.cont [5/16] 0.0, 128
    %435 = vxpose.xlu0.b32.cont [6/16] 0.0, 128
    %436 = vxpose.xlu0.b32.cont [7/16] 0.0, 128
    %437 = vxpose.xlu0.b32.cont [8/16] 0.0, 128
    %438 = vxpose.xlu0.b32.cont [9/16] 0.0, 128
    %439 = vxpose.xlu0.b32.cont [10/16] 0.0, 128
    %440 = vxpose.xlu0.b32.cont [11/16] 0.0, 128
    %441 = vxpose.xlu0.b32.cont [12/16] 0.0, 128
    %442 = vxpose.xlu0.b32.cont [13/16] 0.0, 128
    %443 = vxpose.xlu0.b32.cont [14/16] 0.0, 128
    %444 = vxpose.xlu0.b32.cont [15/16] 0.0, 128
    %445 = vxpose.xlu0.b32.end [16/16] 0.0, 128
    %v446 = vpop.trf.xlu0
    %v447 = vpop.trf.xlu0
    %v448 = vpop.trf.xlu0
    %v449 = vpop.trf.xlu0
    %v450 = vpop.trf.xlu0
    %v451 = vpop.trf.xlu0
    %v452 = vpop.trf.xlu0
    %v453 = vpop.trf.xlu0
    %v454 = vpop.trf.xlu0
    %v455 = vpop.trf.xlu0
    %v456 = vpop.trf.xlu0
    %v457 = vpop.trf.xlu0
    %v458 = vpop.trf.xlu0
    %v459 = vpop.trf.xlu0
    %v460 = vpop.trf.xlu0
    %v461 = vpop.trf.xlu0
    %463 = vrot.lane.b32.xlu0 %v162, 96
    %v464 = vpop.permute.xlu0 %463
    %vm465 = vcmask 261120
    %v467 = vsel %vm465, %v446, 0
    %v469 = vsel %vm465, %v464, 0
    %471 = vmatprep.subr.mxu0 0.0
    %472 = vmatpush1.xpose.msra.mxu0 %v469
    %473 = vmatprep.subr.mxu0 0.0
    %474 = vmatpush1.xpose.msra.mxu0 0.0
    %475 = vmatprep.subr.mxu0 0.0
    %476 = vmatpush1.xpose.msra.mxu0 0.0
    %477 = vmatprep.subr.mxu0 0.0
    %478 = vmatpush1.xpose.msra.mxu0 0.0
    %479 = vmatprep.subr.mxu0 0.0
    %480 = vmatpush1.xpose.msra.mxu0 0.0
    %481 = vmatprep.subr.mxu0 0.0
    %482 = vmatpush1.xpose.msra.mxu0 0.0
    %483 = vmatprep.subr.mxu0 0.0
    %484 = vmatpush1.xpose.msra.mxu0 0.0
    %485 = vmatprep.subr.mxu0 0.0
    %486 = vmatpush1.xpose.msra.mxu0 0.0
    %487 = vmatprep.subr.mxu0 0.0
    %488 = vmatpush1.xpose.msra.mxu0 0.0
    %489 = vmatprep.subr.mxu0 0.0
    %490 = vmatpush1.xpose.msra.mxu0 0.0
    %491 = vmatprep.subr.mxu0 0.0
    %492 = vmatpush1.xpose.msra.mxu0 0.0
    %493 = vmatprep.subr.mxu0 0.0
    %494 = vmatpush1.xpose.msra.mxu0 0.0
    %495 = vmatprep.subr.mxu0 0.0
    %496 = vmatpush1.xpose.msra.mxu0 0.0
    %497 = vmatprep.subr.mxu0 0.0
    %498 = vmatpush1.xpose.msra.mxu0 0.0
    %499 = vmatprep.subr.mxu0 0.0
    %500 = vmatpush1.xpose.msra.mxu0 0.0
    %501 = vmatprep.subr.mxu0 0.0
    %502 = vmatpush1.xpose.msra.mxu0 0.0
    %503 = vmatprep.subr.mxu0 0.0
    %504 = vmatpush1.xpose.msra.mxu0 0.0
    %505 = vmatprep.subr.mxu0 0.0
    %506 = vmatpush1.xpose.msra.mxu0 0.0
    %507 = vmatprep.subr.mxu0 0.0
    %508 = vmatpush1.xpose.msra.mxu0 0.0
    %509 = vmatprep.subr.mxu0 0.0
    %510 = vmatpush1.xpose.msra.mxu0 0.0
    %511 = vmatprep.subr.mxu0 0.0
    %512 = vmatpush1.xpose.msra.mxu0 0.0
    %513 = vmatprep.subr.mxu0 0.0
    %514 = vmatpush1.xpose.msra.mxu0 0.0
    %515 = vmatprep.subr.mxu0 0.0
    %516 = vmatpush1.xpose.msra.mxu0 0.0
    %517 = vmatprep.subr.mxu0 0.0
    %518 = vmatpush1.xpose.msra.mxu0 0.0
    %519 = vmatprep.subr.mxu0 0.0
    %520 = vmatpush1.xpose.msra.mxu0 0.0
    %521 = vmatprep.subr.mxu0 0.0
    %522 = vmatpush1.xpose.msra.mxu0 0.0
    %523 = vmatprep.subr.mxu0 0.0
    %524 = vmatpush1.xpose.msra.mxu0 0.0
    %525 = vmatprep.subr.mxu0 0.0
    %526 = vmatpush1.xpose.msra.mxu0 0.0
    %527 = vmatprep.subr.mxu0 0.0
    %528 = vmatpush1.xpose.msra.mxu0 0.0
    %529 = vmatprep.subr.mxu0 0.0
    %530 = vmatpush1.xpose.msra.mxu0 0.0
    %531 = vmatprep.subr.mxu0 0.0
    %532 = vmatpush1.xpose.msra.mxu0 0.0
    %533 = vmatprep.subr.mxu0 0.0
    %534 = vmatpush1.xpose.msra.mxu0 0.0
    %535 = vmatprep.mubr.f32.mxu0 0.0
    %536 = vmatmul.mubr.f32.gmra.mrb[0].mxu0 %v467
    %v537 = vpop.f32.mrb[0].mxu0
    %v538 = vadd.f32 0.0, %v537
    %v539 = vpop.f32.mrb[0].mxu0
    %540 = vdwg.mxu0
    %v542 = vsel %vm465, %v336, 0
    %544 = vmatprep.subr.mxu0 0.0
    %545 = vmatpush1.msra.mxu0 %v424
    %546 = vmatprep.subr.mxu0 0.0
    %547 = vmatpush1.msra.mxu0 %v425
    %548 = vmatprep.subr.mxu0 0.0
    %549 = vmatpush1.msra.mxu0 %v426
    %550 = vmatprep.subr.mxu0 0.0
    %551 = vmatpush1.msra.mxu0 %v427
    %552 = vmatprep.subr.mxu0 0.0
    %553 = vmatpush1.msra.mxu0 0.0
    %554 = vmatprep.subr.mxu0 0.0
    %555 = vmatpush1.msra.mxu0 0.0
    %556 = vmatprep.subr.mxu0 0.0
    %557 = vmatpush1.msra.mxu0 0.0
    %558 = vmatprep.subr.mxu0 0.0
    %559 = vmatpush1.msra.mxu0 0.0
    %560 = vmatprep.subr.mxu0 0.0
    %561 = vmatpush1.msra.mxu0 0.0
    %562 = vmatprep.subr.mxu0 0.0
    %563 = vmatpush1.msra.mxu0 0.0
    %564 = vmatprep.subr.mxu0 0.0
    %565 = vmatpush1.msra.mxu0 0.0
    %566 = vmatprep.subr.mxu0 0.0
    %567 = vmatpush1.msra.mxu0 0.0
    %568 = vmatprep.subr.mxu0 0.0
    %569 = vmatpush1.msra.mxu0 0.0
    %570 = vmatprep.subr.mxu0 0.0
    %571 = vmatpush1.msra.mxu0 0.0
    %572 = vmatprep.subr.mxu0 0.0
    %573 = vmatpush1.msra.mxu0 0.0
    %574 = vmatprep.subr.mxu0 0.0
    %575 = vmatpush1.msra.mxu0 0.0
    %576 = vmatprep.subr.mxu0 0.0
    %577 = vmatpush1.msra.mxu0 0.0
    %578 = vmatprep.subr.mxu0 0.0
    %579 = vmatpush1.msra.mxu0 0.0
    %580 = vmatprep.subr.mxu0 0.0
    %581 = vmatpush1.msra.mxu0 0.0
    %582 = vmatprep.subr.mxu0 0.0
    %583 = vmatpush1.msra.mxu0 0.0
    %584 = vmatprep.subr.mxu0 0.0
    %585 = vmatpush1.msra.mxu0 0.0
    %586 = vmatprep.subr.mxu0 0.0
    %587 = vmatpush1.msra.mxu0 0.0
    %588 = vmatprep.subr.mxu0 0.0
    %589 = vmatpush1.msra.mxu0 0.0
    %590 = vmatprep.subr.mxu0 0.0
    %591 = vmatpush1.msra.mxu0 0.0
    %592 = vmatprep.subr.mxu0 0.0
    %593 = vmatpush1.msra.mxu0 0.0
    %594 = vmatprep.subr.mxu0 0.0
    %595 = vmatpush1.msra.mxu0 0.0
    %596 = vmatprep.subr.mxu0 0.0
    %597 = vmatpush1.msra.mxu0 0.0
    %598 = vmatprep.subr.mxu0 0.0
    %599 = vmatpush1.msra.mxu0 0.0
    %600 = vmatprep.subr.mxu0 0.0
    %601 = vmatpush1.msra.mxu0 0.0
    %602 = vmatprep.subr.mxu0 0.0
    %603 = vmatpush1.msra.mxu0 0.0
    %604 = vmatprep.subr.mxu0 0.0
    %605 = vmatpush1.msra.mxu0 0.0
    %606 = vmatprep.subr.mxu0 0.0
    %607 = vmatpush1.msra.mxu0 0.0
    %608 = vmatprep.mubr.f32.mxu0 0.0
    %609 = vmatmul.mubr.f32.gmra.mrb[0].mxu0 %v542
    %v610 = vpop.f32.mrb[0].mxu0
    %v611 = vadd.f32 0.0, %v610
    %v612 = vpop.f32.mrb[0].mxu0
    %613 = vdwg.mxu0
    %615 = vset.pattern.permute.xlu0 0
    %616 = vperm.xlu0 %615, %v611
    %v617 = vpop.permute.xlu0 %616
    %v619 = vlaneseq
    %v620 = vshrl.u32 %v619, 7
    %v621 = vsub.s32 0, %v620
    %v622 = vrot.slane %v538, %v621
    %v623 = vadd.f32 %v617, %v622
    %vm624 = vcmp.ge.f32.partialorder %v623, 0.0
    %v625 = vmul.f32 %v623, 0.2
    %v626 = vsel %vm624, %v623, %v625
    %v627 = vsel %vm429, %v626, -1e+30
    %vm628 = vcmask 17408
    %v629 = vsel %vm628, %v627, -inf
    %630 = vmax.xlane.f32.xlu0 %v629
    %v631 = vpop.xlane.xlu0 %630
    %v632 = vsub.f32 %v627, %v631
    %v633 = vmul.f32 %v632, 1.442695
    %v634 = vpow.pop %v633
    %v635 = vsel %vm429, %v634, 0.0
    %v636 = vsel %vm628, %v635, 0.0
    %637 = vadd.xlane.f32.xlu0 %v636
    %v638 = vpop.xlane.xlu0 %637
    %vm639 = vcmp.gt.f32.partialorder %v638, 0.0
    %v640 = vsel %vm639, %v638, 1.0
    %v641 = vrcp.pop %v640
    %v642 = vmul.f32 %v635, %v641
    %vm643 = vcmask 23552
    %v645 = vsel %vm643, %v642, 0
    %vm647 = vcmask 1042432
    %v648 = vsel %vm647, %v464, 0
    %650 = vmatprep.subr.mxu0 0.0
    %651 = vmatpush1.msra.mxu0 %v648
    %652 = vmatprep.subr.mxu0 0.0
    %653 = vmatpush1.msra.mxu0 0.0
    %654 = vmatprep.subr.mxu0 0.0
    %655 = vmatpush1.msra.mxu0 0.0
    %656 = vmatprep.subr.mxu0 0.0
    %657 = vmatpush1.msra.mxu0 0.0
    %658 = vmatprep.subr.mxu0 0.0
    %659 = vmatpush1.msra.mxu0 0.0
    %660 = vmatprep.subr.mxu0 0.0
    %661 = vmatpush1.msra.mxu0 0.0
    %662 = vmatprep.subr.mxu0 0.0
    %663 = vmatpush1.msra.mxu0 0.0
    %664 = vmatprep.subr.mxu0 0.0
    %665 = vmatpush1.msra.mxu0 0.0
    %666 = vmatprep.subr.mxu0 0.0
    %667 = vmatpush1.msra.mxu0 0.0
    %668 = vmatprep.subr.mxu0 0.0
    %669 = vmatpush1.msra.mxu0 0.0
    %670 = vmatprep.subr.mxu0 0.0
    %671 = vmatpush1.msra.mxu0 0.0
    %672 = vmatprep.subr.mxu0 0.0
    %673 = vmatpush1.msra.mxu0 0.0
    %674 = vmatprep.subr.mxu0 0.0
    %675 = vmatpush1.msra.mxu0 0.0
    %676 = vmatprep.subr.mxu0 0.0
    %677 = vmatpush1.msra.mxu0 0.0
    %678 = vmatprep.subr.mxu0 0.0
    %679 = vmatpush1.msra.mxu0 0.0
    %680 = vmatprep.subr.mxu0 0.0
    %681 = vmatpush1.msra.mxu0 0.0
    %682 = vmatprep.subr.mxu0 0.0
    %683 = vmatpush1.msra.mxu0 0.0
    %684 = vmatprep.subr.mxu0 0.0
    %685 = vmatpush1.msra.mxu0 0.0
    %686 = vmatprep.subr.mxu0 0.0
    %687 = vmatpush1.msra.mxu0 0.0
    %688 = vmatprep.subr.mxu0 0.0
    %689 = vmatpush1.msra.mxu0 0.0
    %690 = vmatprep.subr.mxu0 0.0
    %691 = vmatpush1.msra.mxu0 0.0
    %692 = vmatprep.subr.mxu0 0.0
    %693 = vmatpush1.msra.mxu0 0.0
    %694 = vmatprep.subr.mxu0 0.0
    %695 = vmatpush1.msra.mxu0 0.0
    %696 = vmatprep.subr.mxu0 0.0
    %697 = vmatpush1.msra.mxu0 0.0
    %698 = vmatprep.subr.mxu0 0.0
    %699 = vmatpush1.msra.mxu0 0.0
    %700 = vmatprep.subr.mxu0 0.0
    %701 = vmatpush1.msra.mxu0 0.0
    %702 = vmatprep.subr.mxu0 0.0
    %703 = vmatpush1.msra.mxu0 0.0
    %704 = vmatprep.subr.mxu0 0.0
    %705 = vmatpush1.msra.mxu0 0.0
    %706 = vmatprep.subr.mxu0 0.0
    %707 = vmatpush1.msra.mxu0 0.0
    %708 = vmatprep.subr.mxu0 0.0
    %709 = vmatpush1.msra.mxu0 0.0
    %710 = vmatprep.subr.mxu0 0.0
    %711 = vmatpush1.msra.mxu0 0.0
    %712 = vmatprep.subr.mxu0 0.0
    %713 = vmatpush1.msra.mxu0 0.0
    %714 = vmatprep.mubr.f32.mxu0 0.0
    %715 = vmatmul.mubr.f32.gmra.mrb[0].mxu0 %v645
    %v716 = vpop.f32.mrb[0].mxu0
    %v717 = vadd.f32 0.0, %v716
    %v718 = vpop.f32.mrb[0].mxu0
    %719 = vdwg.mxu0
    %720 = vset.pattern.permute.xlu0 1
    %721 = vperm.xlu0 %720, %v611
    %v722 = vpop.permute.xlu0 %721
    %v724 = vlaneseq
    %v725 = vshrl.u32 %v724, 7
    %v726 = vsub.s32 1, %v725
    %v727 = vrot.slane %v538, %v726
    %v728 = vadd.f32 %v722, %v727
    %vm729 = vcmp.ge.f32.partialorder %v728, 0.0
    %v730 = vmul.f32 %v728, 0.2
    %v731 = vsel %vm729, %v728, %v730
    %v732 = vsel %vm429, %v731, -1e+30
    %v733 = vsel %vm628, %v732, -inf
    %734 = vmax.xlane.f32.xlu0 %v733
    %v735 = vpop.xlane.xlu0 %734
    %v736 = vsub.f32 %v732, %v735
    %v737 = vmul.f32 %v736, 1.442695
    %v738 = vpow.pop %v737
    %v739 = vsel %vm429, %v738, 0.0
    %v740 = vsel %vm628, %v739, 0.0
    %741 = vadd.xlane.f32.xlu0 %v740
    %v742 = vpop.xlane.xlu0 %741
    %vm743 = vcmp.gt.f32.partialorder %v742, 0.0
    %v744 = vsel %vm743, %v742, 1.0
    %v745 = vrcp.pop %v744
    %v746 = vmul.f32 %v739, %v745
    %747 = vrot.lane.b32.xlu0 %v162, 88
    %v748 = vpop.permute.xlu0 %747
    %v750 = vsel %vm643, %v746, 0
    %v752 = vsel %vm647, %v748, 0
    %754 = vmatprep.subr.mxu0 0.0
    %755 = vmatpush1.msra.mxu0 %v752
    %756 = vmatprep.subr.mxu0 0.0
    %757 = vmatpush1.msra.mxu0 0.0
    %758 = vmatprep.subr.mxu0 0.0
    %759 = vmatpush1.msra.mxu0 0.0
    %760 = vmatprep.subr.mxu0 0.0
    %761 = vmatpush1.msra.mxu0 0.0
    %762 = vmatprep.subr.mxu0 0.0
    %763 = vmatpush1.msra.mxu0 0.0
    %764 = vmatprep.subr.mxu0 0.0
    %765 = vmatpush1.msra.mxu0 0.0
    %766 = vmatprep.subr.mxu0 0.0
    %767 = vmatpush1.msra.mxu0 0.0
    %768 = vmatprep.subr.mxu0 0.0
    %769 = vmatpush1.msra.mxu0 0.0
    %770 = vmatprep.subr.mxu0 0.0
    %771 = vmatpush1.msra.mxu0 0.0
    %772 = vmatprep.subr.mxu0 0.0
    %773 = vmatpush1.msra.mxu0 0.0
    %774 = vmatprep.subr.mxu0 0.0
    %775 = vmatpush1.msra.mxu0 0.0
    %776 = vmatprep.subr.mxu0 0.0
    %777 = vmatpush1.msra.mxu0 0.0
    %778 = vmatprep.subr.mxu0 0.0
    %779 = vmatpush1.msra.mxu0 0.0
    %780 = vmatprep.subr.mxu0 0.0
    %781 = vmatpush1.msra.mxu0 0.0
    %782 = vmatprep.subr.mxu0 0.0
    %783 = vmatpush1.msra.mxu0 0.0
    %784 = vmatprep.subr.mxu0 0.0
    %785 = vmatpush1.msra.mxu0 0.0
    %786 = vmatprep.subr.mxu0 0.0
    %787 = vmatpush1.msra.mxu0 0.0
    %788 = vmatprep.subr.mxu0 0.0
    %789 = vmatpush1.msra.mxu0 0.0
    %790 = vmatprep.subr.mxu0 0.0
    %791 = vmatpush1.msra.mxu0 0.0
    %792 = vmatprep.subr.mxu0 0.0
    %793 = vmatpush1.msra.mxu0 0.0
    %794 = vmatprep.subr.mxu0 0.0
    %795 = vmatpush1.msra.mxu0 0.0
    %796 = vmatprep.subr.mxu0 0.0
    %797 = vmatpush1.msra.mxu0 0.0
    %798 = vmatprep.subr.mxu0 0.0
    %799 = vmatpush1.msra.mxu0 0.0
    %800 = vmatprep.subr.mxu0 0.0
    %801 = vmatpush1.msra.mxu0 0.0
    %802 = vmatprep.subr.mxu0 0.0
    %803 = vmatpush1.msra.mxu0 0.0
    %804 = vmatprep.subr.mxu0 0.0
    %805 = vmatpush1.msra.mxu0 0.0
    %806 = vmatprep.subr.mxu0 0.0
    %807 = vmatpush1.msra.mxu0 0.0
    %808 = vmatprep.subr.mxu0 0.0
    %809 = vmatpush1.msra.mxu0 0.0
    %810 = vmatprep.subr.mxu0 0.0
    %811 = vmatpush1.msra.mxu0 0.0
    %812 = vmatprep.subr.mxu0 0.0
    %813 = vmatpush1.msra.mxu0 0.0
    %814 = vmatprep.subr.mxu0 0.0
    %815 = vmatpush1.msra.mxu0 0.0
    %816 = vmatprep.subr.mxu0 0.0
    %817 = vmatpush1.msra.mxu0 0.0
    %818 = vmatprep.mubr.f32.mxu0 0.0
    %819 = vmatmul.mubr.f32.gmra.mrb[0].mxu0 %v750
    %v820 = vpop.f32.mrb[0].mxu0
    %v821 = vadd.f32 0.0, %v820
    %v822 = vpop.f32.mrb[0].mxu0
    %823 = vdwg.mxu0
    %824 = vset.pattern.permute.xlu0 2
    %825 = vperm.xlu0 %824, %v611
    %v826 = vpop.permute.xlu0 %825
    %v828 = vlaneseq
    %v829 = vshrl.u32 %v828, 7
    %v830 = vsub.s32 2, %v829
    %v831 = vrot.slane %v538, %v830
    %v832 = vadd.f32 %v826, %v831
    %vm833 = vcmp.ge.f32.partialorder %v832, 0.0
    %v834 = vmul.f32 %v832, 0.2
    %v835 = vsel %vm833, %v832, %v834
    %v836 = vsel %vm429, %v835, -1e+30
    %v837 = vsel %vm628, %v836, -inf
    %838 = vmax.xlane.f32.xlu0 %v837
    %v839 = vpop.xlane.xlu0 %838
    %v840 = vsub.f32 %v836, %v839
    %v841 = vmul.f32 %v840, 1.442695
    %v842 = vpow.pop %v841
    %v843 = vsel %vm429, %v842, 0.0
    %v844 = vsel %vm628, %v843, 0.0
    %845 = vadd.xlane.f32.xlu0 %v844
    %v846 = vpop.xlane.xlu0 %845
    %vm847 = vcmp.gt.f32.partialorder %v846, 0.0
    %v848 = vsel %vm847, %v846, 1.0
    %v849 = vrcp.pop %v848
    %v850 = vmul.f32 %v843, %v849
    %851 = vrot.lane.b32.xlu0 %v162, 80
    %v852 = vpop.permute.xlu0 %851
    %v854 = vsel %vm643, %v850, 0
    %v856 = vsel %vm647, %v852, 0
    %858 = vmatprep.subr.mxu0 0.0
    %859 = vmatpush1.msra.mxu0 %v856
    %860 = vmatprep.subr.mxu0 0.0
    %861 = vmatpush1.msra.mxu0 0.0
    %862 = vmatprep.subr.mxu0 0.0
    %863 = vmatpush1.msra.mxu0 0.0
    %864 = vmatprep.subr.mxu0 0.0
    %865 = vmatpush1.msra.mxu0 0.0
    %866 = vmatprep.subr.mxu0 0.0
    %867 = vmatpush1.msra.mxu0 0.0
    %868 = vmatprep.subr.mxu0 0.0
    %869 = vmatpush1.msra.mxu0 0.0
    %870 = vmatprep.subr.mxu0 0.0
    %871 = vmatpush1.msra.mxu0 0.0
    %872 = vmatprep.subr.mxu0 0.0
    %873 = vmatpush1.msra.mxu0 0.0
    %874 = vmatprep.subr.mxu0 0.0
    %875 = vmatpush1.msra.mxu0 0.0
    %876 = vmatprep.subr.mxu0 0.0
    %877 = vmatpush1.msra.mxu0 0.0
    %878 = vmatprep.subr.mxu0 0.0
    %879 = vmatpush1.msra.mxu0 0.0
    %880 = vmatprep.subr.mxu0 0.0
    %881 = vmatpush1.msra.mxu0 0.0
    %882 = vmatprep.subr.mxu0 0.0
    %883 = vmatpush1.msra.mxu0 0.0
    %884 = vmatprep.subr.mxu0 0.0
    %885 = vmatpush1.msra.mxu0 0.0
    %886 = vmatprep.subr.mxu0 0.0
    %887 = vmatpush1.msra.mxu0 0.0
    %888 = vmatprep.subr.mxu0 0.0
    %889 = vmatpush1.msra.mxu0 0.0
    %890 = vmatprep.subr.mxu0 0.0
    %891 = vmatpush1.msra.mxu0 0.0
    %892 = vmatprep.subr.mxu0 0.0
    %893 = vmatpush1.msra.mxu0 0.0
    %894 = vmatprep.subr.mxu0 0.0
    %895 = vmatpush1.msra.mxu0 0.0
    %896 = vmatprep.subr.mxu0 0.0
    %897 = vmatpush1.msra.mxu0 0.0
    %898 = vmatprep.subr.mxu0 0.0
    %899 = vmatpush1.msra.mxu0 0.0
    %900 = vmatprep.subr.mxu0 0.0
    %901 = vmatpush1.msra.mxu0 0.0
    %902 = vmatprep.subr.mxu0 0.0
    %903 = vmatpush1.msra.mxu0 0.0
    %904 = vmatprep.subr.mxu0 0.0
    %905 = vmatpush1.msra.mxu0 0.0
    %906 = vmatprep.subr.mxu0 0.0
    %907 = vmatpush1.msra.mxu0 0.0
    %908 = vmatprep.subr.mxu0 0.0
    %909 = vmatpush1.msra.mxu0 0.0
    %910 = vmatprep.subr.mxu0 0.0
    %911 = vmatpush1.msra.mxu0 0.0
    %912 = vmatprep.subr.mxu0 0.0
    %913 = vmatpush1.msra.mxu0 0.0
    %914 = vmatprep.subr.mxu0 0.0
    %915 = vmatpush1.msra.mxu0 0.0
    %916 = vmatprep.subr.mxu0 0.0
    %917 = vmatpush1.msra.mxu0 0.0
    %918 = vmatprep.subr.mxu0 0.0
    %919 = vmatpush1.msra.mxu0 0.0
    %920 = vmatprep.subr.mxu0 0.0
    %921 = vmatpush1.msra.mxu0 0.0
    %922 = vmatprep.mubr.f32.mxu0 0.0
    %923 = vmatmul.mubr.f32.gmra.mrb[0].mxu0 %v854
    %v924 = vpop.f32.mrb[0].mxu0
    %v925 = vadd.f32 0.0, %v924
    %v926 = vpop.f32.mrb[0].mxu0
    %927 = vdwg.mxu0
    %928 = vset.pattern.permute.xlu0 3
    %929 = vperm.xlu0 %928, %v611
    %v930 = vpop.permute.xlu0 %929
    %v932 = vlaneseq
    %v933 = vshrl.u32 %v932, 7
    %v934 = vsub.s32 3, %v933
    %v935 = vrot.slane %v538, %v934
    %v936 = vadd.f32 %v930, %v935
    %vm937 = vcmp.ge.f32.partialorder %v936, 0.0
    %v938 = vmul.f32 %v936, 0.2
    %v939 = vsel %vm937, %v936, %v938
    %v940 = vsel %vm429, %v939, -1e+30
    %v941 = vsel %vm628, %v940, -inf
    %942 = vmax.xlane.f32.xlu0 %v941
    %v943 = vpop.xlane.xlu0 %942
    %v944 = vsub.f32 %v940, %v943
    %v945 = vmul.f32 %v944, 1.442695
    %v946 = vpow.pop %v945
    %v947 = vsel %vm429, %v946, 0.0
    %v948 = vsel %vm628, %v947, 0.0
    %949 = vadd.xlane.f32.xlu0 %v948
    %v950 = vpop.xlane.xlu0 %949
    %vm951 = vcmp.gt.f32.partialorder %v950, 0.0
    %v952 = vsel %vm951, %v950, 1.0
    %v953 = vrcp.pop %v952
    %v954 = vmul.f32 %v947, %v953
    %955 = vrot.lane.b32.xlu0 %v162, 72
    %v956 = vpop.permute.xlu0 %955
    %v958 = vsel %vm643, %v954, 0
    %v960 = vsel %vm647, %v956, 0
    %962 = vmatprep.subr.mxu0 0.0
    %963 = vmatpush1.msra.mxu0 %v960
    %964 = vmatprep.subr.mxu0 0.0
    %965 = vmatpush1.msra.mxu0 0.0
    %966 = vmatprep.subr.mxu0 0.0
    %967 = vmatpush1.msra.mxu0 0.0
    %968 = vmatprep.subr.mxu0 0.0
    %969 = vmatpush1.msra.mxu0 0.0
    %970 = vmatprep.subr.mxu0 0.0
    %971 = vmatpush1.msra.mxu0 0.0
    %972 = vmatprep.subr.mxu0 0.0
    %973 = vmatpush1.msra.mxu0 0.0
    %974 = vmatprep.subr.mxu0 0.0
    %975 = vmatpush1.msra.mxu0 0.0
    %976 = vmatprep.subr.mxu0 0.0
    %977 = vmatpush1.msra.mxu0 0.0
    %978 = vmatprep.subr.mxu0 0.0
    %979 = vmatpush1.msra.mxu0 0.0
    %980 = vmatprep.subr.mxu0 0.0
    %981 = vmatpush1.msra.mxu0 0.0
    %982 = vmatprep.subr.mxu0 0.0
    %983 = vmatpush1.msra.mxu0 0.0
    %984 = vmatprep.subr.mxu0 0.0
    %985 = vmatpush1.msra.mxu0 0.0
    %986 = vmatprep.subr.mxu0 0.0
    %987 = vmatpush1.msra.mxu0 0.0
    %988 = vmatprep.subr.mxu0 0.0
    %989 = vmatpush1.msra.mxu0 0.0
    %990 = vmatprep.subr.mxu0 0.0
    %991 = vmatpush1.msra.mxu0 0.0
    %992 = vmatprep.subr.mxu0 0.0
    %993 = vmatpush1.msra.mxu0 0.0
    %994 = vmatprep.subr.mxu0 0.0
    %995 = vmatpush1.msra.mxu0 0.0
    %996 = vmatprep.subr.mxu0 0.0
    %997 = vmatpush1.msra.mxu0 0.0
    %998 = vmatprep.subr.mxu0 0.0
    %999 = vmatpush1.msra.mxu0 0.0
    %1000 = vmatprep.subr.mxu0 0.0
    %1001 = vmatpush1.msra.mxu0 0.0
    %1002 = vmatprep.subr.mxu0 0.0
    %1003 = vmatpush1.msra.mxu0 0.0
    %1004 = vmatprep.subr.mxu0 0.0
    %1005 = vmatpush1.msra.mxu0 0.0
    %1006 = vmatprep.subr.mxu0 0.0
    %1007 = vmatpush1.msra.mxu0 0.0
    %1008 = vmatprep.subr.mxu0 0.0
    %1009 = vmatpush1.msra.mxu0 0.0
    %1010 = vmatprep.subr.mxu0 0.0
    %1011 = vmatpush1.msra.mxu0 0.0
    %1012 = vmatprep.subr.mxu0 0.0
    %1013 = vmatpush1.msra.mxu0 0.0
    %1014 = vmatprep.subr.mxu0 0.0
    %1015 = vmatpush1.msra.mxu0 0.0
    %1016 = vmatprep.subr.mxu0 0.0
    %1017 = vmatpush1.msra.mxu0 0.0
    %1018 = vmatprep.subr.mxu0 0.0
    %1019 = vmatpush1.msra.mxu0 0.0
    %1020 = vmatprep.subr.mxu0 0.0
    %1021 = vmatpush1.msra.mxu0 0.0
    %1022 = vmatprep.subr.mxu0 0.0
    %1023 = vmatpush1.msra.mxu0 0.0
    %1024 = vmatprep.subr.mxu0 0.0
    %1025 = vmatpush1.msra.mxu0 0.0
    %1026 = vmatprep.mubr.f32.mxu0 0.0
    %1027 = vmatmul.mubr.f32.gmra.mrb[0].mxu0 %v958
    %v1028 = vpop.f32.mrb[0].mxu0
    %v1029 = vadd.f32 0.0, %v1028
    %v1030 = vpop.f32.mrb[0].mxu0
    %1031 = vdwg.mxu0
    %1033 = vrot.lane.b32.xlu0 %v821, 8
    %v1034 = vpop.permute.xlu0 %1033
    %1037 = vrot.lane.b32.xlu0 %v925, 16
    %v1038 = vpop.permute.xlu0 %1037
    %1041 = vrot.lane.b32.xlu0 %v1029, 24
    %v1042 = vpop.permute.xlu0 %1041
    %vm1044 = vcmask 64512
    %v1045 = vsel %vm1044, %v717, %v1034
    %vm1046 = vcmask 130048
    %v1047 = vsel %vm1046, %v1045, %v1038
    %vm1048 = vcmask 195584
    %v1049 = vsel %vm1048, %v1047, %v1042
    %v1050 = vld [vmem:[%s14] sm:$0xff]
    %v1051 = vld [vmem:[%s14 + $0x8] sm:$0xff]
    %v1052 = vld [vmem:[%s14 + $0x10] sm:$0xff]
    %v1053 = vld [vmem:[%s14 + $0x18] sm:$0xff]
    %v1054 = vld [vmem:[%s15] sm:$0xff]
    %v1055 = vld [vmem:[%s15 + $0x8] sm:$0xff]
    %v1056 = vld [vmem:[%s15 + $0x10] sm:$0xff]
    %v1057 = vld [vmem:[%s15 + $0x18] sm:$0xff]
    %v1058 = vld [vmem:[%s17] sm:$0x3]
    %vm1059 = vcmp.gt.f32.partialorder %v1058, 0.0
    %1060 = vxpose.xlu0.b32.start [1/16] %v1050, 128
    %1061 = vxpose.xlu0.b32.cont [2/16] %v1051, 128
    %1062 = vxpose.xlu0.b32.cont [3/16] %v1052, 128
    %1063 = vxpose.xlu0.b32.cont [4/16] %v1053, 128
    %1064 = vxpose.xlu0.b32.cont [5/16] 0.0, 128
    %1065 = vxpose.xlu0.b32.cont [6/16] 0.0, 128
    %1066 = vxpose.xlu0.b32.cont [7/16] 0.0, 128
    %1067 = vxpose.xlu0.b32.cont [8/16] 0.0, 128
    %1068 = vxpose.xlu0.b32.cont [9/16] 0.0, 128
    %1069 = vxpose.xlu0.b32.cont [10/16] 0.0, 128
    %1070 = vxpose.xlu0.b32.cont [11/16] 0.0, 128
    %1071 = vxpose.xlu0.b32.cont [12/16] 0.0, 128
    %1072 = vxpose.xlu0.b32.cont [13/16] 0.0, 128
    %1073 = vxpose.xlu0.b32.cont [14/16] 0.0, 128
    %1074 = vxpose.xlu0.b32.cont [15/16] 0.0, 128
    %1075 = vxpose.xlu0.b32.end [16/16] 0.0, 128
    %v1076 = vpop.trf.xlu0
    %v1077 = vpop.trf.xlu0
    %v1078 = vpop.trf.xlu0
    %v1079 = vpop.trf.xlu0
    %v1080 = vpop.trf.xlu0
    %v1081 = vpop.trf.xlu0
    %v1082 = vpop.trf.xlu0
    %v1083 = vpop.trf.xlu0
    %v1084 = vpop.trf.xlu0
    %v1085 = vpop.trf.xlu0
    %v1086 = vpop.trf.xlu0
    %v1087 = vpop.trf.xlu0
    %v1088 = vpop.trf.xlu0
    %v1089 = vpop.trf.xlu0
    %v1090 = vpop.trf.xlu0
    %v1091 = vpop.trf.xlu0
    %1093 = vrot.lane.b32.xlu0 %v249, 104
    %v1094 = vpop.permute.xlu0 %1093
    %v1096 = vsel %vm465, %v1076, 0
    %v1098 = vsel %vm465, %v1094, 0
    %1100 = vmatprep.subr.mxu0 0.0
    %1101 = vmatpush1.xpose.msra.mxu0 %v1098
    %1102 = vmatprep.subr.mxu0 0.0
    %1103 = vmatpush1.xpose.msra.mxu0 0.0
    %1104 = vmatprep.subr.mxu0 0.0
    %1105 = vmatpush1.xpose.msra.mxu0 0.0
    %1106 = vmatprep.subr.mxu0 0.0
    %1107 = vmatpush1.xpose.msra.mxu0 0.0
    %1108 = vmatprep.subr.mxu0 0.0
    %1109 = vmatpush1.xpose.msra.mxu0 0.0
    %1110 = vmatprep.subr.mxu0 0.0
    %1111 = vmatpush1.xpose.msra.mxu0 0.0
    %1112 = vmatprep.subr.mxu0 0.0
    %1113 = vmatpush1.xpose.msra.mxu0 0.0
    %1114 = vmatprep.subr.mxu0 0.0
    %1115 = vmatpush1.xpose.msra.mxu0 0.0
    %1116 = vmatprep.subr.mxu0 0.0
    %1117 = vmatpush1.xpose.msra.mxu0 0.0
    %1118 = vmatprep.subr.mxu0 0.0
    %1119 = vmatpush1.xpose.msra.mxu0 0.0
    %1120 = vmatprep.subr.mxu0 0.0
    %1121 = vmatpush1.xpose.msra.mxu0 0.0
    %1122 = vmatprep.subr.mxu0 0.0
    %1123 = vmatpush1.xpose.msra.mxu0 0.0
    %1124 = vmatprep.subr.mxu0 0.0
    %1125 = vmatpush1.xpose.msra.mxu0 0.0
    %1126 = vmatprep.subr.mxu0 0.0
    %1127 = vmatpush1.xpose.msra.mxu0 0.0
    %1128 = vmatprep.subr.mxu0 0.0
    %1129 = vmatpush1.xpose.msra.mxu0 0.0
    %1130 = vmatprep.subr.mxu0 0.0
    %1131 = vmatpush1.xpose.msra.mxu0 0.0
    %1132 = vmatprep.subr.mxu0 0.0
    %1133 = vmatpush1.xpose.msra.mxu0 0.0
    %1134 = vmatprep.subr.mxu0 0.0
    %1135 = vmatpush1.xpose.msra.mxu0 0.0
    %1136 = vmatprep.subr.mxu0 0.0
    %1137 = vmatpush1.xpose.msra.mxu0 0.0
    %1138 = vmatprep.subr.mxu0 0.0
    %1139 = vmatpush1.xpose.msra.mxu0 0.0
    %1140 = vmatprep.subr.mxu0 0.0
    %1141 = vmatpush1.xpose.msra.mxu0 0.0
    %1142 = vmatprep.subr.mxu0 0.0
    %1143 = vmatpush1.xpose.msra.mxu0 0.0
    %1144 = vmatprep.subr.mxu0 0.0
    %1145 = vmatpush1.xpose.msra.mxu0 0.0
    %1146 = vmatprep.subr.mxu0 0.0
    %1147 = vmatpush1.xpose.msra.mxu0 0.0
    %1148 = vmatprep.subr.mxu0 0.0
    %1149 = vmatpush1.xpose.msra.mxu0 0.0
    %1150 = vmatprep.subr.mxu0 0.0
    %1151 = vmatpush1.xpose.msra.mxu0 0.0
    %1152 = vmatprep.subr.mxu0 0.0
    %1153 = vmatpush1.xpose.msra.mxu0 0.0
    %1154 = vmatprep.subr.mxu0 0.0
    %1155 = vmatpush1.xpose.msra.mxu0 0.0
    %1156 = vmatprep.subr.mxu0 0.0
    %1157 = vmatpush1.xpose.msra.mxu0 0.0
    %1158 = vmatprep.subr.mxu0 0.0
    %1159 = vmatpush1.xpose.msra.mxu0 0.0
    %1160 = vmatprep.subr.mxu0 0.0
    %1161 = vmatpush1.xpose.msra.mxu0 0.0
    %1162 = vmatprep.subr.mxu0 0.0
    %1163 = vmatpush1.xpose.msra.mxu0 0.0
    %1164 = vmatprep.mubr.f32.mxu0 0.0
    %1165 = vmatmul.mubr.f32.gmra.mrb[0].mxu0 %v1096
    %v1166 = vpop.f32.mrb[0].mxu0
    %v1167 = vadd.f32 0.0, %v1166
    %v1168 = vpop.f32.mrb[0].mxu0
    %1169 = vdwg.mxu0
    %1170 = vmatprep.subr.mxu0 0.0
    %1171 = vmatpush1.msra.mxu0 %v1054
    %1172 = vmatprep.subr.mxu0 0.0
    %1173 = vmatpush1.msra.mxu0 %v1055
    %1174 = vmatprep.subr.mxu0 0.0
    %1175 = vmatpush1.msra.mxu0 %v1056
    %1176 = vmatprep.subr.mxu0 0.0
    %1177 = vmatpush1.msra.mxu0 %v1057
    %1178 = vmatprep.subr.mxu0 0.0
    %1179 = vmatpush1.msra.mxu0 0.0
    %1180 = vmatprep.subr.mxu0 0.0
    %1181 = vmatpush1.msra.mxu0 0.0
    %1182 = vmatprep.subr.mxu0 0.0
    %1183 = vmatpush1.msra.mxu0 0.0
    %1184 = vmatprep.subr.mxu0 0.0
    %1185 = vmatpush1.msra.mxu0 0.0
    %1186 = vmatprep.subr.mxu0 0.0
    %1187 = vmatpush1.msra.mxu0 0.0
    %1188 = vmatprep.subr.mxu0 0.0
    %1189 = vmatpush1.msra.mxu0 0.0
    %1190 = vmatprep.subr.mxu0 0.0
    %1191 = vmatpush1.msra.mxu0 0.0
    %1192 = vmatprep.subr.mxu0 0.0
    %1193 = vmatpush1.msra.mxu0 0.0
    %1194 = vmatprep.subr.mxu0 0.0
    %1195 = vmatpush1.msra.mxu0 0.0
    %1196 = vmatprep.subr.mxu0 0.0
    %1197 = vmatpush1.msra.mxu0 0.0
    %1198 = vmatprep.subr.mxu0 0.0
    %1199 = vmatpush1.msra.mxu0 0.0
    %1200 = vmatprep.subr.mxu0 0.0
    %1201 = vmatpush1.msra.mxu0 0.0
    %1202 = vmatprep.subr.mxu0 0.0
    %1203 = vmatpush1.msra.mxu0 0.0
    %1204 = vmatprep.subr.mxu0 0.0
    %1205 = vmatpush1.msra.mxu0 0.0
    %1206 = vmatprep.subr.mxu0 0.0
    %1207 = vmatpush1.msra.mxu0 0.0
    %1208 = vmatprep.subr.mxu0 0.0
    %1209 = vmatpush1.msra.mxu0 0.0
    %1210 = vmatprep.subr.mxu0 0.0
    %1211 = vmatpush1.msra.mxu0 0.0
    %1212 = vmatprep.subr.mxu0 0.0
    %1213 = vmatpush1.msra.mxu0 0.0
    %1214 = vmatprep.subr.mxu0 0.0
    %1215 = vmatpush1.msra.mxu0 0.0
    %1216 = vmatprep.subr.mxu0 0.0
    %1217 = vmatpush1.msra.mxu0 0.0
    %1218 = vmatprep.subr.mxu0 0.0
    %1219 = vmatpush1.msra.mxu0 0.0
    %1220 = vmatprep.subr.mxu0 0.0
    %1221 = vmatpush1.msra.mxu0 0.0
    %1222 = vmatprep.subr.mxu0 0.0
    %1223 = vmatpush1.msra.mxu0 0.0
    %1224 = vmatprep.subr.mxu0 0.0
    %1225 = vmatpush1.msra.mxu0 0.0
    %1226 = vmatprep.subr.mxu0 0.0
    %1227 = vmatpush1.msra.mxu0 0.0
    %1228 = vmatprep.subr.mxu0 0.0
    %1229 = vmatpush1.msra.mxu0 0.0
    %1230 = vmatprep.subr.mxu0 0.0
    %1231 = vmatpush1.msra.mxu0 0.0
    %1232 = vmatprep.subr.mxu0 0.0
    %1233 = vmatpush1.msra.mxu0 0.0
    %1234 = vmatprep.mubr.f32.mxu0 0.0
    %1235 = vmatmul.mubr.f32.gmra.mrb[0].mxu0 %v542
    %v1236 = vpop.f32.mrb[0].mxu0
    %v1237 = vadd.f32 0.0, %v1236
    %v1238 = vpop.f32.mrb[0].mxu0
    %1239 = vdwg.mxu0
    %1241 = vset.pattern.permute.xlu0 0
    %1242 = vperm.xlu0 %1241, %v1237
    %v1243 = vpop.permute.xlu0 %1242
    %v1245 = vlaneseq
    %v1246 = vshrl.u32 %v1245, 7
    %v1247 = vsub.s32 0, %v1246
    %v1248 = vrot.slane %v1167, %v1247
    %v1249 = vadd.f32 %v1243, %v1248
    %vm1250 = vcmp.ge.f32.partialorder %v1249, 0.0
    %v1251 = vmul.f32 %v1249, 0.2
    %v1252 = vsel %vm1250, %v1249, %v1251
    %v1253 = vsel %vm1059, %v1252, -1e+30
    %vm1254 = vcmask 25600
    %v1255 = vsel %vm1254, %v1253, -inf
    %1256 = vmax.xlane.f32.xlu0 %v1255
    %v1257 = vpop.xlane.xlu0 %1256
    %v1258 = vsub.f32 %v1253, %v1257
    %v1259 = vmul.f32 %v1258, 1.442695
    %v1260 = vpow.pop %v1259
    %v1261 = vsel %vm1059, %v1260, 0.0
    %v1262 = vsel %vm1254, %v1261, 0.0
    %1263 = vadd.xlane.f32.xlu0 %v1262
    %v1264 = vpop.xlane.xlu0 %1263
    %vm1265 = vcmp.gt.f32.partialorder %v1264, 0.0
    %v1266 = vsel %vm1265, %v1264, 1.0
    %v1267 = vrcp.pop %v1266
    %v1268 = vmul.f32 %v1261, %v1267
    %v1270 = vsel %vm342, %v1268, 0
    %v1272 = vsel %vm346, %v1094, 0
    %1274 = vmatprep.subr.mxu0 0.0
    %1275 = vmatpush1.msra.mxu0 %v1272
    %1276 = vmatprep.subr.mxu0 0.0
    %1277 = vmatpush1.msra.mxu0 0.0
    %1278 = vmatprep.subr.mxu0 0.0
    %1279 = vmatpush1.msra.mxu0 0.0
    %1280 = vmatprep.subr.mxu0 0.0
    %1281 = vmatpush1.msra.mxu0 0.0
    %1282 = vmatprep.subr.mxu0 0.0
    %1283 = vmatpush1.msra.mxu0 0.0
    %1284 = vmatprep.subr.mxu0 0.0
    %1285 = vmatpush1.msra.mxu0 0.0
    %1286 = vmatprep.subr.mxu0 0.0
    %1287 = vmatpush1.msra.mxu0 0.0
    %1288 = vmatprep.subr.mxu0 0.0
    %1289 = vmatpush1.msra.mxu0 0.0
    %1290 = vmatprep.subr.mxu0 0.0
    %1291 = vmatpush1.msra.mxu0 0.0
    %1292 = vmatprep.subr.mxu0 0.0
    %1293 = vmatpush1.msra.mxu0 0.0
    %1294 = vmatprep.subr.mxu0 0.0
    %1295 = vmatpush1.msra.mxu0 0.0
    %1296 = vmatprep.subr.mxu0 0.0
    %1297 = vmatpush1.msra.mxu0 0.0
    %1298 = vmatprep.subr.mxu0 0.0
    %1299 = vmatpush1.msra.mxu0 0.0
    %1300 = vmatprep.subr.mxu0 0.0
    %1301 = vmatpush1.msra.mxu0 0.0
    %1302 = vmatprep.subr.mxu0 0.0
    %1303 = vmatpush1.msra.mxu0 0.0
    %1304 = vmatprep.subr.mxu0 0.0
    %1305 = vmatpush1.msra.mxu0 0.0
    %1306 = vmatprep.subr.mxu0 0.0
    %1307 = vmatpush1.msra.mxu0 0.0
    %1308 = vmatprep.subr.mxu0 0.0
    %1309 = vmatpush1.msra.mxu0 0.0
    %1310 = vmatprep.subr.mxu0 0.0
    %1311 = vmatpush1.msra.mxu0 0.0
    %1312 = vmatprep.subr.mxu0 0.0
    %1313 = vmatpush1.msra.mxu0 0.0
    %1314 = vmatprep.subr.mxu0 0.0
    %1315 = vmatpush1.msra.mxu0 0.0
    %1316 = vmatprep.subr.mxu0 0.0
    %1317 = vmatpush1.msra.mxu0 0.0
    %1318 = vmatprep.subr.mxu0 0.0
    %1319 = vmatpush1.msra.mxu0 0.0
    %1320 = vmatprep.subr.mxu0 0.0
    %1321 = vmatpush1.msra.mxu0 0.0
    %1322 = vmatprep.subr.mxu0 0.0
    %1323 = vmatpush1.msra.mxu0 0.0
    %1324 = vmatprep.subr.mxu0 0.0
    %1325 = vmatpush1.msra.mxu0 0.0
    %1326 = vmatprep.subr.mxu0 0.0
    %1327 = vmatpush1.msra.mxu0 0.0
    %1328 = vmatprep.subr.mxu0 0.0
    %1329 = vmatpush1.msra.mxu0 0.0
    %1330 = vmatprep.subr.mxu0 0.0
    %1331 = vmatpush1.msra.mxu0 0.0
    %1332 = vmatprep.subr.mxu0 0.0
    %1333 = vmatpush1.msra.mxu0 0.0
    %1334 = vmatprep.subr.mxu0 0.0
    %1335 = vmatpush1.msra.mxu0 0.0
    %1336 = vmatprep.subr.mxu0 0.0
    %1337 = vmatpush1.msra.mxu0 0.0
    %1338 = vmatprep.mubr.f32.mxu0 0.0
    %1339 = vmatmul.mubr.f32.gmra.mrb[0].mxu0 %v1270
    %v1340 = vpop.f32.mrb[0].mxu0
    %v1341 = vadd.f32 0.0, %v1340
    %v1342 = vpop.f32.mrb[0].mxu0
    %1343 = vdwg.mxu0
    %1344 = vset.pattern.permute.xlu0 1
    %1345 = vperm.xlu0 %1344, %v1237
    %v1346 = vpop.permute.xlu0 %1345
    %v1348 = vlaneseq
    %v1349 = vshrl.u32 %v1348, 7
    %v1350 = vsub.s32 1, %v1349
    %v1351 = vrot.slane %v1167, %v1350
    %v1352 = vadd.f32 %v1346, %v1351
    %vm1353 = vcmp.ge.f32.partialorder %v1352, 0.0
    %v1354 = vmul.f32 %v1352, 0.2
    %v1355 = vsel %vm1353, %v1352, %v1354
    %v1356 = vsel %vm1059, %v1355, -1e+30
    %v1357 = vsel %vm1254, %v1356, -inf
    %1358 = vmax.xlane.f32.xlu0 %v1357
    %v1359 = vpop.xlane.xlu0 %1358
    %v1360 = vsub.f32 %v1356, %v1359
    %v1361 = vmul.f32 %v1360, 1.442695
    %v1362 = vpow.pop %v1361
    %v1363 = vsel %vm1059, %v1362, 0.0
    %v1364 = vsel %vm1254, %v1363, 0.0
    %1365 = vadd.xlane.f32.xlu0 %v1364
    %v1366 = vpop.xlane.xlu0 %1365
    %vm1367 = vcmp.gt.f32.partialorder %v1366, 0.0
    %v1368 = vsel %vm1367, %v1366, 1.0
    %v1369 = vrcp.pop %v1368
    %v1370 = vmul.f32 %v1363, %v1369
    %1371 = vrot.lane.b32.xlu0 %v249, 96
    %v1372 = vpop.permute.xlu0 %1371
    %v1374 = vsel %vm342, %v1370, 0
    %v1376 = vsel %vm346, %v1372, 0
    %1378 = vmatprep.subr.mxu0 0.0
    %1379 = vmatpush1.msra.mxu0 %v1376
    %1380 = vmatprep.subr.mxu0 0.0
    %1381 = vmatpush1.msra.mxu0 0.0
    %1382 = vmatprep.subr.mxu0 0.0
    %1383 = vmatpush1.msra.mxu0 0.0
    %1384 = vmatprep.subr.mxu0 0.0
    %1385 = vmatpush1.msra.mxu0 0.0
    %1386 = vmatprep.subr.mxu0 0.0
    %1387 = vmatpush1.msra.mxu0 0.0
    %1388 = vmatprep.subr.mxu0 0.0
    %1389 = vmatpush1.msra.mxu0 0.0
    %1390 = vmatprep.subr.mxu0 0.0
    %1391 = vmatpush1.msra.mxu0 0.0
    %1392 = vmatprep.subr.mxu0 0.0
    %1393 = vmatpush1.msra.mxu0 0.0
    %1394 = vmatprep.subr.mxu0 0.0
    %1395 = vmatpush1.msra.mxu0 0.0
    %1396 = vmatprep.subr.mxu0 0.0
    %1397 = vmatpush1.msra.mxu0 0.0
    %1398 = vmatprep.subr.mxu0 0.0
    %1399 = vmatpush1.msra.mxu0 0.0
    %1400 = vmatprep.subr.mxu0 0.0
    %1401 = vmatpush1.msra.mxu0 0.0
    %1402 = vmatprep.subr.mxu0 0.0
    %1403 = vmatpush1.msra.mxu0 0.0
    %1404 = vmatprep.subr.mxu0 0.0
    %1405 = vmatpush1.msra.mxu0 0.0
    %1406 = vmatprep.subr.mxu0 0.0
    %1407 = vmatpush1.msra.mxu0 0.0
    %1408 = vmatprep.subr.mxu0 0.0
    %1409 = vmatpush1.msra.mxu0 0.0
    %1410 = vmatprep.subr.mxu0 0.0
    %1411 = vmatpush1.msra.mxu0 0.0
    %1412 = vmatprep.subr.mxu0 0.0
    %1413 = vmatpush1.msra.mxu0 0.0
    %1414 = vmatprep.subr.mxu0 0.0
    %1415 = vmatpush1.msra.mxu0 0.0
    %1416 = vmatprep.subr.mxu0 0.0
    %1417 = vmatpush1.msra.mxu0 0.0
    %1418 = vmatprep.subr.mxu0 0.0
    %1419 = vmatpush1.msra.mxu0 0.0
    %1420 = vmatprep.subr.mxu0 0.0
    %1421 = vmatpush1.msra.mxu0 0.0
    %1422 = vmatprep.subr.mxu0 0.0
    %1423 = vmatpush1.msra.mxu0 0.0
    %1424 = vmatprep.subr.mxu0 0.0
    %1425 = vmatpush1.msra.mxu0 0.0
    %1426 = vmatprep.subr.mxu0 0.0
    %1427 = vmatpush1.msra.mxu0 0.0
    %1428 = vmatprep.subr.mxu0 0.0
    %1429 = vmatpush1.msra.mxu0 0.0
    %1430 = vmatprep.subr.mxu0 0.0
    %1431 = vmatpush1.msra.mxu0 0.0
    %1432 = vmatprep.subr.mxu0 0.0
    %1433 = vmatpush1.msra.mxu0 0.0
    %1434 = vmatprep.subr.mxu0 0.0
    %1435 = vmatpush1.msra.mxu0 0.0
    %1436 = vmatprep.subr.mxu0 0.0
    %1437 = vmatpush1.msra.mxu0 0.0
    %1438 = vmatprep.subr.mxu0 0.0
    %1439 = vmatpush1.msra.mxu0 0.0
    %1440 = vmatprep.subr.mxu0 0.0
    %1441 = vmatpush1.msra.mxu0 0.0
    %1442 = vmatprep.mubr.f32.mxu0 0.0
    %1443 = vmatmul.mubr.f32.gmra.mrb[0].mxu0 %v1374
    %v1444 = vpop.f32.mrb[0].mxu0
    %v1445 = vadd.f32 0.0, %v1444
    %v1446 = vpop.f32.mrb[0].mxu0
    %1447 = vdwg.mxu0
    %1448 = vset.pattern.permute.xlu0 2
    %1449 = vperm.xlu0 %1448, %v1237
    %v1450 = vpop.permute.xlu0 %1449
    %v1452 = vlaneseq
    %v1453 = vshrl.u32 %v1452, 7
    %v1454 = vsub.s32 2, %v1453
    %v1455 = vrot.slane %v1167, %v1454
    %v1456 = vadd.f32 %v1450, %v1455
    %vm1457 = vcmp.ge.f32.partialorder %v1456, 0.0
    %v1458 = vmul.f32 %v1456, 0.2
    %v1459 = vsel %vm1457, %v1456, %v1458
    %v1460 = vsel %vm1059, %v1459, -1e+30
    %v1461 = vsel %vm1254, %v1460, -inf
    %1462 = vmax.xlane.f32.xlu0 %v1461
    %v1463 = vpop.xlane.xlu0 %1462
    %v1464 = vsub.f32 %v1460, %v1463
    %v1465 = vmul.f32 %v1464, 1.442695
    %v1466 = vpow.pop %v1465
    %v1467 = vsel %vm1059, %v1466, 0.0
    %v1468 = vsel %vm1254, %v1467, 0.0
    %1469 = vadd.xlane.f32.xlu0 %v1468
    %v1470 = vpop.xlane.xlu0 %1469
    %vm1471 = vcmp.gt.f32.partialorder %v1470, 0.0
    %v1472 = vsel %vm1471, %v1470, 1.0
    %v1473 = vrcp.pop %v1472
    %v1474 = vmul.f32 %v1467, %v1473
    %1475 = vrot.lane.b32.xlu0 %v249, 88
    %v1476 = vpop.permute.xlu0 %1475
    %v1478 = vsel %vm342, %v1474, 0
    %v1480 = vsel %vm346, %v1476, 0
    %1482 = vmatprep.subr.mxu0 0.0
    %1483 = vmatpush1.msra.mxu0 %v1480
    %1484 = vmatprep.subr.mxu0 0.0
    %1485 = vmatpush1.msra.mxu0 0.0
    %1486 = vmatprep.subr.mxu0 0.0
    %1487 = vmatpush1.msra.mxu0 0.0
    %1488 = vmatprep.subr.mxu0 0.0
    %1489 = vmatpush1.msra.mxu0 0.0
    %1490 = vmatprep.subr.mxu0 0.0
    %1491 = vmatpush1.msra.mxu0 0.0
    %1492 = vmatprep.subr.mxu0 0.0
    %1493 = vmatpush1.msra.mxu0 0.0
    %1494 = vmatprep.subr.mxu0 0.0
    %1495 = vmatpush1.msra.mxu0 0.0
    %1496 = vmatprep.subr.mxu0 0.0
    %1497 = vmatpush1.msra.mxu0 0.0
    %1498 = vmatprep.subr.mxu0 0.0
    %1499 = vmatpush1.msra.mxu0 0.0
    %1500 = vmatprep.subr.mxu0 0.0
    %1501 = vmatpush1.msra.mxu0 0.0
    %1502 = vmatprep.subr.mxu0 0.0
    %1503 = vmatpush1.msra.mxu0 0.0
    %1504 = vmatprep.subr.mxu0 0.0
    %1505 = vmatpush1.msra.mxu0 0.0
    %1506 = vmatprep.subr.mxu0 0.0
    %1507 = vmatpush1.msra.mxu0 0.0
    %1508 = vmatprep.subr.mxu0 0.0
    %1509 = vmatpush1.msra.mxu0 0.0
    %1510 = vmatprep.subr.mxu0 0.0
    %1511 = vmatpush1.msra.mxu0 0.0
    %1512 = vmatprep.subr.mxu0 0.0
    %1513 = vmatpush1.msra.mxu0 0.0
    %1514 = vmatprep.subr.mxu0 0.0
    %1515 = vmatpush1.msra.mxu0 0.0
    %1516 = vmatprep.subr.mxu0 0.0
    %1517 = vmatpush1.msra.mxu0 0.0
    %1518 = vmatprep.subr.mxu0 0.0
    %1519 = vmatpush1.msra.mxu0 0.0
    %1520 = vmatprep.subr.mxu0 0.0
    %1521 = vmatpush1.msra.mxu0 0.0
    %1522 = vmatprep.subr.mxu0 0.0
    %1523 = vmatpush1.msra.mxu0 0.0
    %1524 = vmatprep.subr.mxu0 0.0
    %1525 = vmatpush1.msra.mxu0 0.0
    %1526 = vmatprep.subr.mxu0 0.0
    %1527 = vmatpush1.msra.mxu0 0.0
    %1528 = vmatprep.subr.mxu0 0.0
    %1529 = vmatpush1.msra.mxu0 0.0
    %1530 = vmatprep.subr.mxu0 0.0
    %1531 = vmatpush1.msra.mxu0 0.0
    %1532 = vmatprep.subr.mxu0 0.0
    %1533 = vmatpush1.msra.mxu0 0.0
    %1534 = vmatprep.subr.mxu0 0.0
    %1535 = vmatpush1.msra.mxu0 0.0
    %1536 = vmatprep.subr.mxu0 0.0
    %1537 = vmatpush1.msra.mxu0 0.0
    %1538 = vmatprep.subr.mxu0 0.0
    %1539 = vmatpush1.msra.mxu0 0.0
    %1540 = vmatprep.subr.mxu0 0.0
    %1541 = vmatpush1.msra.mxu0 0.0
    %1542 = vmatprep.subr.mxu0 0.0
    %1543 = vmatpush1.msra.mxu0 0.0
    %1544 = vmatprep.subr.mxu0 0.0
    %1545 = vmatpush1.msra.mxu0 0.0
    %1546 = vmatprep.mubr.f32.mxu0 0.0
    %1547 = vmatmul.mubr.f32.gmra.mrb[0].mxu0 %v1478
    %v1548 = vpop.f32.mrb[0].mxu0
    %v1549 = vadd.f32 0.0, %v1548
    %v1550 = vpop.f32.mrb[0].mxu0
    %1551 = vdwg.mxu0
    %1552 = vset.pattern.permute.xlu0 3
    %1553 = vperm.xlu0 %1552, %v1237
    %v1554 = vpop.permute.xlu0 %1553
    %v1556 = vlaneseq
    %v1557 = vshrl.u32 %v1556, 7
    %v1558 = vsub.s32 3, %v1557
    %v1559 = vrot.slane %v1167, %v1558
    %v1560 = vadd.f32 %v1554, %v1559
    %vm1561 = vcmp.ge.f32.partialorder %v1560, 0.0
    %v1562 = vmul.f32 %v1560, 0.2
    %v1563 = vsel %vm1561, %v1560, %v1562
    %v1564 = vsel %vm1059, %v1563, -1e+30
    %v1565 = vsel %vm1254, %v1564, -inf
    %1566 = vmax.xlane.f32.xlu0 %v1565
    %v1567 = vpop.xlane.xlu0 %1566
    %v1568 = vsub.f32 %v1564, %v1567
    %v1569 = vmul.f32 %v1568, 1.442695
    %v1570 = vpow.pop %v1569
    %v1571 = vsel %vm1059, %v1570, 0.0
    %v1572 = vsel %vm1254, %v1571, 0.0
    %1573 = vadd.xlane.f32.xlu0 %v1572
    %v1574 = vpop.xlane.xlu0 %1573
    %vm1575 = vcmp.gt.f32.partialorder %v1574, 0.0
    %v1576 = vsel %vm1575, %v1574, 1.0
    %v1577 = vrcp.pop %v1576
    %v1578 = vmul.f32 %v1571, %v1577
    %1579 = vrot.lane.b32.xlu0 %v249, 80
    %v1580 = vpop.permute.xlu0 %1579
    %v1582 = vsel %vm342, %v1578, 0
    %v1584 = vsel %vm346, %v1580, 0
    %1586 = vmatprep.subr.mxu0 0.0
    %1587 = vmatpush1.msra.mxu0 %v1584
    %1588 = vmatprep.subr.mxu0 0.0
    %1589 = vmatpush1.msra.mxu0 0.0
    %1590 = vmatprep.subr.mxu0 0.0
    %1591 = vmatpush1.msra.mxu0 0.0
    %1592 = vmatprep.subr.mxu0 0.0
    %1593 = vmatpush1.msra.mxu0 0.0
    %1594 = vmatprep.subr.mxu0 0.0
    %1595 = vmatpush1.msra.mxu0 0.0
    %1596 = vmatprep.subr.mxu0 0.0
    %1597 = vmatpush1.msra.mxu0 0.0
    %1598 = vmatprep.subr.mxu0 0.0
    %1599 = vmatpush1.msra.mxu0 0.0
    %1600 = vmatprep.subr.mxu0 0.0
    %1601 = vmatpush1.msra.mxu0 0.0
    %1602 = vmatprep.subr.mxu0 0.0
    %1603 = vmatpush1.msra.mxu0 0.0
    %1604 = vmatprep.subr.mxu0 0.0
    %1605 = vmatpush1.msra.mxu0 0.0
    %1606 = vmatprep.subr.mxu0 0.0
    %1607 = vmatpush1.msra.mxu0 0.0
    %1608 = vmatprep.subr.mxu0 0.0
    %1609 = vmatpush1.msra.mxu0 0.0
    %1610 = vmatprep.subr.mxu0 0.0
    %1611 = vmatpush1.msra.mxu0 0.0
    %1612 = vmatprep.subr.mxu0 0.0
    %1613 = vmatpush1.msra.mxu0 0.0
    %1614 = vmatprep.subr.mxu0 0.0
    %1615 = vmatpush1.msra.mxu0 0.0
    %1616 = vmatprep.subr.mxu0 0.0
    %1617 = vmatpush1.msra.mxu0 0.0
    %1618 = vmatprep.subr.mxu0 0.0
    %1619 = vmatpush1.msra.mxu0 0.0
    %1620 = vmatprep.subr.mxu0 0.0
    %1621 = vmatpush1.msra.mxu0 0.0
    %1622 = vmatprep.subr.mxu0 0.0
    %1623 = vmatpush1.msra.mxu0 0.0
    %1624 = vmatprep.subr.mxu0 0.0
    %1625 = vmatpush1.msra.mxu0 0.0
    %1626 = vmatprep.subr.mxu0 0.0
    %1627 = vmatpush1.msra.mxu0 0.0
    %1628 = vmatprep.subr.mxu0 0.0
    %1629 = vmatpush1.msra.mxu0 0.0
    %1630 = vmatprep.subr.mxu0 0.0
    %1631 = vmatpush1.msra.mxu0 0.0
    %1632 = vmatprep.subr.mxu0 0.0
    %1633 = vmatpush1.msra.mxu0 0.0
    %1634 = vmatprep.subr.mxu0 0.0
    %1635 = vmatpush1.msra.mxu0 0.0
    %1636 = vmatprep.subr.mxu0 0.0
    %1637 = vmatpush1.msra.mxu0 0.0
    %1638 = vmatprep.subr.mxu0 0.0
    %1639 = vmatpush1.msra.mxu0 0.0
    %1640 = vmatprep.subr.mxu0 0.0
    %1641 = vmatpush1.msra.mxu0 0.0
    %1642 = vmatprep.subr.mxu0 0.0
    %1643 = vmatpush1.msra.mxu0 0.0
    %1644 = vmatprep.subr.mxu0 0.0
    %1645 = vmatpush1.msra.mxu0 0.0
    %1646 = vmatprep.subr.mxu0 0.0
    %1647 = vmatpush1.msra.mxu0 0.0
    %1648 = vmatprep.subr.mxu0 0.0
    %1649 = vmatpush1.msra.mxu0 0.0
    %1650 = vmatprep.mubr.f32.mxu0 0.0
    %1651 = vmatmul.mubr.f32.gmra.mrb[0].mxu0 %v1582
    %v1652 = vpop.f32.mrb[0].mxu0
    %v1653 = vadd.f32 0.0, %v1652
    %v1654 = vpop.f32.mrb[0].mxu0
    %1655 = vdwg.mxu0
    %1657 = vrot.lane.b32.xlu0 %v1445, 8
    %v1658 = vpop.permute.xlu0 %1657
    %1661 = vrot.lane.b32.xlu0 %v1549, 16
    %v1662 = vpop.permute.xlu0 %1661
    %1665 = vrot.lane.b32.xlu0 %v1653, 24
    %v1666 = vpop.permute.xlu0 %1665
    %v1668 = vsel %vm1044, %v1341, %v1658
    %v1669 = vsel %vm1046, %v1668, %v1662
    %v1670 = vsel %vm1048, %v1669, %v1666
    %v1671 = vld [vmem:[%s19] sm:$0x7]
    %1672 = vrot.lane.b32.xlu0 %v249, 56
    %v1673 = vpop.permute.xlu0 %1672
    %v1675 = vsel %vm342, %v1671, 0
    %v1677 = vsel %vm346, %v1673, 0
    %1679 = vmatprep.subr.mxu0 0.0
    %1680 = vmatpush1.msra.mxu0 %v1677
    %1681 = vmatprep.subr.mxu0 0.0
    %1682 = vmatpush1.msra.mxu0 0.0
    %1683 = vmatprep.subr.mxu0 0.0
    %1684 = vmatpush1.msra.mxu0 0.0
    %1685 = vmatprep.subr.mxu0 0.0
    %1686 = vmatpush1.msra.mxu0 0.0
    %1687 = vmatprep.subr.mxu0 0.0
    %1688 = vmatpush1.msra.mxu0 0.0
    %1689 = vmatprep.subr.mxu0 0.0
    %1690 = vmatpush1.msra.mxu0 0.0
    %1691 = vmatprep.subr.mxu0 0.0
    %1692 = vmatpush1.msra.mxu0 0.0
    %1693 = vmatprep.subr.mxu0 0.0
    %1694 = vmatpush1.msra.mxu0 0.0
    %1695 = vmatprep.subr.mxu0 0.0
    %1696 = vmatpush1.msra.mxu0 0.0
    %1697 = vmatprep.subr.mxu0 0.0
    %1698 = vmatpush1.msra.mxu0 0.0
    %1699 = vmatprep.subr.mxu0 0.0
    %1700 = vmatpush1.msra.mxu0 0.0
    %1701 = vmatprep.subr.mxu0 0.0
    %1702 = vmatpush1.msra.mxu0 0.0
    %1703 = vmatprep.subr.mxu0 0.0
    %1704 = vmatpush1.msra.mxu0 0.0
    %1705 = vmatprep.subr.mxu0 0.0
    %1706 = vmatpush1.msra.mxu0 0.0
    %1707 = vmatprep.subr.mxu0 0.0
    %1708 = vmatpush1.msra.mxu0 0.0
    %1709 = vmatprep.subr.mxu0 0.0
    %1710 = vmatpush1.msra.mxu0 0.0
    %1711 = vmatprep.subr.mxu0 0.0
    %1712 = vmatpush1.msra.mxu0 0.0
    %1713 = vmatprep.subr.mxu0 0.0
    %1714 = vmatpush1.msra.mxu0 0.0
    %1715 = vmatprep.subr.mxu0 0.0
    %1716 = vmatpush1.msra.mxu0 0.0
    %1717 = vmatprep.subr.mxu0 0.0
    %1718 = vmatpush1.msra.mxu0 0.0
    %1719 = vmatprep.subr.mxu0 0.0
    %1720 = vmatpush1.msra.mxu0 0.0
    %1721 = vmatprep.subr.mxu0 0.0
    %1722 = vmatpush1.msra.mxu0 0.0
    %1723 = vmatprep.subr.mxu0 0.0
    %1724 = vmatpush1.msra.mxu0 0.0
    %1725 = vmatprep.subr.mxu0 0.0
    %1726 = vmatpush1.msra.mxu0 0.0
    %1727 = vmatprep.subr.mxu0 0.0
    %1728 = vmatpush1.msra.mxu0 0.0
    %1729 = vmatprep.subr.mxu0 0.0
    %1730 = vmatpush1.msra.mxu0 0.0
    %1731 = vmatprep.subr.mxu0 0.0
    %1732 = vmatpush1.msra.mxu0 0.0
    %1733 = vmatprep.subr.mxu0 0.0
    %1734 = vmatpush1.msra.mxu0 0.0
    %1735 = vmatprep.subr.mxu0 0.0
    %1736 = vmatpush1.msra.mxu0 0.0
    %1737 = vmatprep.subr.mxu0 0.0
    %1738 = vmatpush1.msra.mxu0 0.0
    %1739 = vmatprep.subr.mxu0 0.0
    %1740 = vmatpush1.msra.mxu0 0.0
    %1741 = vmatprep.subr.mxu0 0.0
    %1742 = vmatpush1.msra.mxu0 0.0
    %1743 = vmatprep.mubr.f32.mxu0 0.0
    %1744 = vmatmul.mubr.f32.gmra.mrb[0].mxu0 %v1675
    %v1745 = vpop.f32.mrb[0].mxu0
    %v1746 = vadd.f32 0.0, %v1745
    %v1747 = vpop.f32.mrb[0].mxu0
    %1748 = vdwg.mxu0
    %v1749 = vld [vmem:[%s18] sm:$0xf]
    %1750 = vrot.lane.b32.xlu0 %v162, 64
    %v1751 = vpop.permute.xlu0 %1750
    %v1753 = vsel %vm643, %v1749, 0
    %v1755 = vsel %vm647, %v1751, 0
    %1757 = vmatprep.subr.mxu0 0.0
    %1758 = vmatpush1.msra.mxu0 %v1755
    %1759 = vmatprep.subr.mxu0 0.0
    %1760 = vmatpush1.msra.mxu0 0.0
    %1761 = vmatprep.subr.mxu0 0.0
    %1762 = vmatpush1.msra.mxu0 0.0
    %1763 = vmatprep.subr.mxu0 0.0
    %1764 = vmatpush1.msra.mxu0 0.0
    %1765 = vmatprep.subr.mxu0 0.0
    %1766 = vmatpush1.msra.mxu0 0.0
    %1767 = vmatprep.subr.mxu0 0.0
    %1768 = vmatpush1.msra.mxu0 0.0
    %1769 = vmatprep.subr.mxu0 0.0
    %1770 = vmatpush1.msra.mxu0 0.0
    %1771 = vmatprep.subr.mxu0 0.0
    %1772 = vmatpush1.msra.mxu0 0.0
    %1773 = vmatprep.subr.mxu0 0.0
    %1774 = vmatpush1.msra.mxu0 0.0
    %1775 = vmatprep.subr.mxu0 0.0
    %1776 = vmatpush1.msra.mxu0 0.0
    %1777 = vmatprep.subr.mxu0 0.0
    %1778 = vmatpush1.msra.mxu0 0.0
    %1779 = vmatprep.subr.mxu0 0.0
    %1780 = vmatpush1.msra.mxu0 0.0
    %1781 = vmatprep.subr.mxu0 0.0
    %1782 = vmatpush1.msra.mxu0 0.0
    %1783 = vmatprep.subr.mxu0 0.0
    %1784 = vmatpush1.msra.mxu0 0.0
    %1785 = vmatprep.subr.mxu0 0.0
    %1786 = vmatpush1.msra.mxu0 0.0
    %1787 = vmatprep.subr.mxu0 0.0
    %1788 = vmatpush1.msra.mxu0 0.0
    %1789 = vmatprep.subr.mxu0 0.0
    %1790 = vmatpush1.msra.mxu0 0.0
    %1791 = vmatprep.subr.mxu0 0.0
    %1792 = vmatpush1.msra.mxu0 0.0
    %1793 = vmatprep.subr.mxu0 0.0
    %1794 = vmatpush1.msra.mxu0 0.0
    %1795 = vmatprep.subr.mxu0 0.0
    %1796 = vmatpush1.msra.mxu0 0.0
    %1797 = vmatprep.subr.mxu0 0.0
    %1798 = vmatpush1.msra.mxu0 0.0
    %1799 = vmatprep.subr.mxu0 0.0
    %1800 = vmatpush1.msra.mxu0 0.0
    %1801 = vmatprep.subr.mxu0 0.0
    %1802 = vmatpush1.msra.mxu0 0.0
    %1803 = vmatprep.subr.mxu0 0.0
    %1804 = vmatpush1.msra.mxu0 0.0
    %1805 = vmatprep.subr.mxu0 0.0
    %1806 = vmatpush1.msra.mxu0 0.0
    %1807 = vmatprep.subr.mxu0 0.0
    %1808 = vmatpush1.msra.mxu0 0.0
    %1809 = vmatprep.subr.mxu0 0.0
    %1810 = vmatpush1.msra.mxu0 0.0
    %1811 = vmatprep.subr.mxu0 0.0
    %1812 = vmatpush1.msra.mxu0 0.0
    %1813 = vmatprep.subr.mxu0 0.0
    %1814 = vmatpush1.msra.mxu0 0.0
    %1815 = vmatprep.subr.mxu0 0.0
    %1816 = vmatpush1.msra.mxu0 0.0
    %1817 = vmatprep.subr.mxu0 0.0
    %1818 = vmatpush1.msra.mxu0 0.0
    %1819 = vmatprep.subr.mxu0 0.0
    %1820 = vmatpush1.msra.mxu0 0.0
    %1821 = vmatprep.mubr.f32.mxu0 0.0
    %1822 = vmatmul.mubr.f32.gmra.mrb[0].mxu0 %v1753
    %v1823 = vpop.f32.mrb[0].mxu0
    %v1824 = vadd.f32 0.0, %v1823
    %v1825 = vpop.f32.mrb[0].mxu0
    %1826 = vdwg.mxu0
    %v1827 = vld [vmem:[%s20] sm:$0x1]
    %1828 = vrot.lane.b32.xlu0 %v249, 72
    %v1829 = vpop.permute.xlu0 %1828
    %v1831 = vsel %vm342, %v1827, 0
    %v1833 = vsel %vm346, %v1829, 0
    %1835 = vmatprep.subr.mxu0 0.0
    %1836 = vmatpush1.msra.mxu0 %v1833
    %1837 = vmatprep.subr.mxu0 0.0
    %1838 = vmatpush1.msra.mxu0 0.0
    %1839 = vmatprep.subr.mxu0 0.0
    %1840 = vmatpush1.msra.mxu0 0.0
    %1841 = vmatprep.subr.mxu0 0.0
    %1842 = vmatpush1.msra.mxu0 0.0
    %1843 = vmatprep.subr.mxu0 0.0
    %1844 = vmatpush1.msra.mxu0 0.0
    %1845 = vmatprep.subr.mxu0 0.0
    %1846 = vmatpush1.msra.mxu0 0.0
    %1847 = vmatprep.subr.mxu0 0.0
    %1848 = vmatpush1.msra.mxu0 0.0
    %1849 = vmatprep.subr.mxu0 0.0
    %1850 = vmatpush1.msra.mxu0 0.0
    %1851 = vmatprep.subr.mxu0 0.0
    %1852 = vmatpush1.msra.mxu0 0.0
    %1853 = vmatprep.subr.mxu0 0.0
    %1854 = vmatpush1.msra.mxu0 0.0
    %1855 = vmatprep.subr.mxu0 0.0
    %1856 = vmatpush1.msra.mxu0 0.0
    %1857 = vmatprep.subr.mxu0 0.0
    %1858 = vmatpush1.msra.mxu0 0.0
    %1859 = vmatprep.subr.mxu0 0.0
    %1860 = vmatpush1.msra.mxu0 0.0
    %1861 = vmatprep.subr.mxu0 0.0
    %1862 = vmatpush1.msra.mxu0 0.0
    %1863 = vmatprep.subr.mxu0 0.0
    %1864 = vmatpush1.msra.mxu0 0.0
    %1865 = vmatprep.subr.mxu0 0.0
    %1866 = vmatpush1.msra.mxu0 0.0
    %1867 = vmatprep.subr.mxu0 0.0
    %1868 = vmatpush1.msra.mxu0 0.0
    %1869 = vmatprep.subr.mxu0 0.0
    %1870 = vmatpush1.msra.mxu0 0.0
    %1871 = vmatprep.subr.mxu0 0.0
    %1872 = vmatpush1.msra.mxu0 0.0
    %1873 = vmatprep.subr.mxu0 0.0
    %1874 = vmatpush1.msra.mxu0 0.0
    %1875 = vmatprep.subr.mxu0 0.0
    %1876 = vmatpush1.msra.mxu0 0.0
    %1877 = vmatprep.subr.mxu0 0.0
    %1878 = vmatpush1.msra.mxu0 0.0
    %1879 = vmatprep.subr.mxu0 0.0
    %1880 = vmatpush1.msra.mxu0 0.0
    %1881 = vmatprep.subr.mxu0 0.0
    %1882 = vmatpush1.msra.mxu0 0.0
    %1883 = vmatprep.subr.mxu0 0.0
    %1884 = vmatpush1.msra.mxu0 0.0
    %1885 = vmatprep.subr.mxu0 0.0
    %1886 = vmatpush1.msra.mxu0 0.0
    %1887 = vmatprep.subr.mxu0 0.0
    %1888 = vmatpush1.msra.mxu0 0.0
    %1889 = vmatprep.subr.mxu0 0.0
    %1890 = vmatpush1.msra.mxu0 0.0
    %1891 = vmatprep.subr.mxu0 0.0
    %1892 = vmatpush1.msra.mxu0 0.0
    %1893 = vmatprep.subr.mxu0 0.0
    %1894 = vmatpush1.msra.mxu0 0.0
    %1895 = vmatprep.subr.mxu0 0.0
    %1896 = vmatpush1.msra.mxu0 0.0
    %1897 = vmatprep.subr.mxu0 0.0
    %1898 = vmatpush1.msra.mxu0 0.0
    %1899 = vmatprep.mubr.f32.mxu0 0.0
    %1900 = vmatmul.mubr.f32.gmra.mrb[0].mxu0 %v1831
    %v1901 = vpop.f32.mrb[0].mxu0
    %v1902 = vadd.f32 0.0, %v1901
    %v1903 = vpop.f32.mrb[0].mxu0
    %1904 = vdwg.mxu0
    %v1905 = vld [vmem:[%s21] sm:$0x1]
    %1906 = vrot.lane.b32.xlu0 %v336, 96
    %v1907 = vpop.permute.xlu0 %1906
    %vm1908 = vcmask 15360
    %v1910 = vsel %vm1908, %v1905, 0
    %vm1912 = vcmask 1041408
    %v1913 = vsel %vm1912, %v1907, 0
    %1915 = vmatprep.subr.mxu0 0.0
    %1916 = vmatpush1.msra.mxu0 %v1913
    %1917 = vmatprep.subr.mxu0 0.0
    %1918 = vmatpush1.msra.mxu0 0.0
    %1919 = vmatprep.subr.mxu0 0.0
    %1920 = vmatpush1.msra.mxu0 0.0
    %1921 = vmatprep.subr.mxu0 0.0
    %1922 = vmatpush1.msra.mxu0 0.0
    %1923 = vmatprep.subr.mxu0 0.0
    %1924 = vmatpush1.msra.mxu0 0.0
    %1925 = vmatprep.subr.mxu0 0.0
    %1926 = vmatpush1.msra.mxu0 0.0
    %1927 = vmatprep.subr.mxu0 0.0
    %1928 = vmatpush1.msra.mxu0 0.0
    %1929 = vmatprep.subr.mxu0 0.0
    %1930 = vmatpush1.msra.mxu0 0.0
    %1931 = vmatprep.subr.mxu0 0.0
    %1932 = vmatpush1.msra.mxu0 0.0
    %1933 = vmatprep.subr.mxu0 0.0
    %1934 = vmatpush1.msra.mxu0 0.0
    %1935 = vmatprep.subr.mxu0 0.0
    %1936 = vmatpush1.msra.mxu0 0.0
    %1937 = vmatprep.subr.mxu0 0.0
    %1938 = vmatpush1.msra.mxu0 0.0
    %1939 = vmatprep.subr.mxu0 0.0
    %1940 = vmatpush1.msra.mxu0 0.0
    %1941 = vmatprep.subr.mxu0 0.0
    %1942 = vmatpush1.msra.mxu0 0.0
    %1943 = vmatprep.subr.mxu0 0.0
    %1944 = vmatpush1.msra.mxu0 0.0
    %1945 = vmatprep.subr.mxu0 0.0
    %1946 = vmatpush1.msra.mxu0 0.0
    %1947 = vmatprep.subr.mxu0 0.0
    %1948 = vmatpush1.msra.mxu0 0.0
    %1949 = vmatprep.subr.mxu0 0.0
    %1950 = vmatpush1.msra.mxu0 0.0
    %1951 = vmatprep.subr.mxu0 0.0
    %1952 = vmatpush1.msra.mxu0 0.0
    %1953 = vmatprep.subr.mxu0 0.0
    %1954 = vmatpush1.msra.mxu0 0.0
    %1955 = vmatprep.subr.mxu0 0.0
    %1956 = vmatpush1.msra.mxu0 0.0
    %1957 = vmatprep.subr.mxu0 0.0
    %1958 = vmatpush1.msra.mxu0 0.0
    %1959 = vmatprep.subr.mxu0 0.0
    %1960 = vmatpush1.msra.mxu0 0.0
    %1961 = vmatprep.subr.mxu0 0.0
    %1962 = vmatpush1.msra.mxu0 0.0
    %1963 = vmatprep.subr.mxu0 0.0
    %1964 = vmatpush1.msra.mxu0 0.0
    %1965 = vmatprep.subr.mxu0 0.0
    %1966 = vmatpush1.msra.mxu0 0.0
    %1967 = vmatprep.subr.mxu0 0.0
    %1968 = vmatpush1.msra.mxu0 0.0
    %1969 = vmatprep.subr.mxu0 0.0
    %1970 = vmatpush1.msra.mxu0 0.0
    %1971 = vmatprep.subr.mxu0 0.0
    %1972 = vmatpush1.msra.mxu0 0.0
    %1973 = vmatprep.subr.mxu0 0.0
    %1974 = vmatpush1.msra.mxu0 0.0
    %1975 = vmatprep.subr.mxu0 0.0
    %1976 = vmatpush1.msra.mxu0 0.0
    %1977 = vmatprep.subr.mxu0 0.0
    %1978 = vmatpush1.msra.mxu0 0.0
    %1979 = vmatprep.mubr.f32.mxu0 0.0
    %1980 = vmatmul.mubr.f32.gmra.mrb[0].mxu0 %v1910
    %v1981 = vpop.f32.mrb[0].mxu0
    %v1982 = vadd.f32 0.0, %v1981
    %v1983 = vpop.f32.mrb[0].mxu0
    %1984 = vdwg.mxu0
    %v1985 = vadd.f32 %v162, %v1746
    %v1986 = vmax.f32 %v1985, 0.0
    %vm1987 = vcmask 256000
    %1988 = vst.msk [vmem:[#allocation2] sm:$0x7] %vm1987, %v1986
    %v1989 = vadd.f32 %v249, %v1824
    %v1990 = vmax.f32 %v1989, 0.0
    %vm1991 = vcmask 191488
    %1992 = vst.msk [vmem:[#allocation4] sm:$0xf] %vm1991, %v1990
    %v1993 = vadd.f32 %v336, %v1049
    %v1994 = vadd.f32 %v1993, %v1670
    %v1995 = vmax.f32 %v1994, 0.0
    %vm1996 = vcmask 254976
    %1997 = vst.msk [vmem:[#allocation6] sm:$0x3] %vm1996, %v1995
    %v1998 = vadd.f32 %v417, %v1902
    %v1999 = vadd.f32 %v1998, %v1982
    %v2000 = vmax.f32 %v1999, 0.0
    %vm2001 = vcmask 122880
    %2002 = vst.msk [vmem:[#allocation7] sm:$0x1] %vm2001, %v2000
    // Predicated region
    $region90: #{tpu_custom_call.1} parent=1 // pred_check
      _
    $region91: #{tpu_custom_call.1} parent=1 // pred_check_branch
      %2004 = sbr.rel (0) target = $region93
    $region92: #{tpu_custom_call.1} parent=1 // pred_region
      %s2006 = ssub.s32 64, 64
      %2007 = vsyncadd [#allocation3], %s2006
      %s2009 = sshll.u32 [#allocation2], 4
      %s2010 = int_to_ptr.vmem [resolvable:$true] %s2009
      %2012 = dma.vmem_to_hbm [thread:$0]  %s2010, 64, %s22, [#allocation3]
    $region93: #{tpu_custom_call.1} parent=1 // pred_fallthru
      _
    // Predicated region
    $region94: #{tpu_custom_call.1} parent=1 // pred_check
      _
    $region95: #{tpu_custom_call.1} parent=1 // pred_check_branch
      %2014 = sbr.rel (0) target = $region97
    $region96: #{tpu_custom_call.1} parent=1 // pred_region
      %s2016 = ssub.s32 64, 64
      %2017 = vsyncadd [#allocation5], %s2016
      %s2019 = sshll.u32 [#allocation4], 4
      %s2020 = int_to_ptr.vmem [resolvable:$true] %s2019
      %2022 = dma.vmem_to_hbm [thread:$0]  %s2020, 64, %s23, [#allocation5]
    $region97: #{tpu_custom_call.1} parent=1 // pred_fallthru
      _
    // Predicated region
    $region98: #{tpu_custom_call.1} parent=1 // pred_check
      _
    $region99: #{tpu_custom_call.1} parent=1 // pred_check_branch
      %2024 = sbr.rel (0) target = $region101
    $region100: #{tpu_custom_call.1} parent=1 // pred_region
      %s2026 = ssub.s32 32, 32
      %2027 = vsyncadd [#allocation5], %s2026
      %s2029 = sshll.u32 [#allocation6], 4
      %s2030 = int_to_ptr.vmem [resolvable:$true] %s2029
      %2032 = dma.vmem_to_hbm [thread:$0]  %s2030, 32, %s24, [#allocation5]
    $region101: #{tpu_custom_call.1} parent=1 // pred_fallthru
      _
    // Predicated region
    $region102: #{tpu_custom_call.1} parent=1 // pred_check
      _
    $region103: #{tpu_custom_call.1} parent=1 // pred_check_branch
      %2034 = sbr.rel (0) target = $region105
    $region104: #{tpu_custom_call.1} parent=1 // pred_region
      %s2036 = ssub.s32 16, 16
      %2037 = vsyncadd [#allocation8], %s2036
      %s2039 = sshll.u32 [#allocation7], 4
      %s2040 = int_to_ptr.vmem [resolvable:$true] %s2039
      %2042 = dma.vmem_to_hbm [thread:$0]  %s2040, 16, %s25, [#allocation8]
    $region105: #{tpu_custom_call.1} parent=1 // pred_fallthru
      _
    // Predicated region
    $region106: #{tpu_custom_call.1} parent=1 // pred_check
      _
    $region107: #{tpu_custom_call.1} parent=1 // pred_check_branch
      %2044 = sbr.rel (0) target = $region109
    $region108: #{tpu_custom_call.1} parent=1 // pred_region
      %2045 = dma.done [#allocation3], 64
    $region109: #{tpu_custom_call.1} parent=1 // pred_fallthru
      _
    // Predicated region
    $region110: #{tpu_custom_call.1} parent=1 // pred_check
      _
    $region111: #{tpu_custom_call.1} parent=1 // pred_check_branch
      %2047 = sbr.rel (0) target = $region113
    $region112: #{tpu_custom_call.1} parent=1 // pred_region
      %2048 = dma.done [#allocation5], 64
    $region113: #{tpu_custom_call.1} parent=1 // pred_fallthru
      _
    // Predicated region
    $region114: #{tpu_custom_call.1} parent=1 // pred_check
      _
    $region115: #{tpu_custom_call.1} parent=1 // pred_check_branch
      %2050 = sbr.rel (0) target = $region117
    $region116: #{tpu_custom_call.1} parent=1 // pred_region
      %2051 = dma.done [#allocation5], 32
    $region117: #{tpu_custom_call.1} parent=1 // pred_fallthru
      _
    // Predicated region
    $region118: #{tpu_custom_call.1} parent=1 // pred_check
      _
    $region119: #{tpu_custom_call.1} parent=1 // pred_check_branch
      %2053 = sbr.rel (0) target = $region121
    $region120: #{tpu_custom_call.1} parent=1 // pred_region
      %2054 = dma.done [#allocation8], 16
    $region121: #{tpu_custom_call.1} parent=1 // pred_fallthru
      _
    %2055 = vsyncpa [#allocation3], 1
    %2056 = vsyncpa [#allocation5], 1
    %2057 = vsyncpa [#allocation8], 1

</llo_original>
